<compile_context>
chip_gen: v5e
topology: v5e:2x2
jax: 0.10.0
libtpu: 0.0.40
codegen_flags: <defaults>
</compile_context>

<pallas_src>
import functools

import jax
import jax.numpy as jnp
from jax.experimental import pallas as pl
from jax.experimental.pallas import tpu as pltpu


def _vecint_kernel(vec_ref, coords_ref, out_ref, img_ref, *, H, W, nsteps,
                   scale, sample_dtype, precision):
    """Scaling-and-squaring integration for one batch block.

    vec_ref    : (bb, 2, 1, Np) input block (Np = lane-padded H*W, flat pixels on lanes)
    coords_ref : (2, 1, Np) constant query coordinates (row 0 = iy, row 1 = jx)
    out_ref    : (bb, 2, 1, Np) output block
    img_ref    : (2, H, W) f32 scratch holding the current field in image layout
    """
    Np = vec_ref.shape[-1]
    bb = vec_ref.shape[0]

    # Hoisted constants (shared by every step / batch element; JAX does not CSE
    # broadcasts so these must not live inside the loops).
    iy = coords_ref[0]                                           # (1, Np) f32
    jx = coords_ref[1]                                           # (1, Np) f32
    row_iota = jax.lax.broadcasted_iota(jnp.int32, (H, Np), 0)   # source row id
    col_iota = jax.lax.broadcasted_iota(jnp.int32, (W, Np), 0)   # source col id

    def step(_, state):
        # state: (2, 1, Np) f32 -- current flow field, flat (lane) layout.

        # ---- flat -> image relayout, channel-fused: one rectangular (2,1,W)
        # store per image row (instead of two (1,W) copies); source comes from
        # the register-carried state, so no loads on this path.
        for r in range(H):
            img_ref[:, r:r + 1, :] = state[:, :, r * W:(r + 1) * W]

        fy = state[0]                                            # (1, Np) flow dy
        fx = state[1]                                            # (1, Np) flow dx

        y = iy + fy
        x = jx + fx
        y0 = jnp.floor(y)
        x0 = jnp.floor(x)
        wy1 = y - y0
        wx1 = x - x0
        y0i = y0.astype(jnp.int32)
        x0i = x0.astype(jnp.int32)
        y1i = y0i + 1
        x1i = x0i + 1

        # Corner weights with the zeros-padding (out-of-bounds) mask folded in.
        wy0v = jnp.where((y0i >= 0) & (y0i < H), 1.0 - wy1, 0.0)
        wy1v = jnp.where((y1i >= 0) & (y1i < H), wy1, 0.0)
        wx0v = jnp.where((x0i >= 0) & (x0i < W), 1.0 - wx1, 0.0)
        wx1v = jnp.where((x1i >= 0) & (x1i < W), wx1, 0.0)

        # Separable bilinear weight matrices (<= 2 nonzeros per query column),
        # fused compare+select.  (pltpu.roll one-hot trick skipped on purpose:
        # it drops the y1/x1 corner when y0i == -1 / x0i == -1.)
        a_mat = (jnp.where(row_iota == y0i, wy0v, 0.0) +
                 jnp.where(row_iota == y1i, wy1v, 0.0))          # (H, Np) f32
        b_mat = (jnp.where(col_iota == x0i, wx0v, 0.0) +
                 jnp.where(col_iota == x1i, wx1v, 0.0))          # (W, Np)
        b_mat = b_mat.astype(sample_dtype)

        # ---- channel-fused x-interpolation on the MXU: one (2H,W)@(W,Np)
        # matmul per step.  For H % 8 == 0 the sublane concatenation is a pure
        # vreg relabeling of the two image planes.
        lhs = jnp.concatenate([img_ref[0], img_ref[1]], axis=0)  # (2H, W)
        t = jnp.dot(lhs.astype(sample_dtype), b_mat,
                    preferred_element_type=jnp.float32,
                    precision=precision)                         # (2H, Np) f32

        # ---- y-interpolation: VPU multiply + cross-sublane reduce per channel.
        s0 = jnp.sum(a_mat * t[:H], axis=0, keepdims=True)       # (1, Np)
        s1 = jnp.sum(a_mat * t[H:], axis=0, keepdims=True)       # (1, Np)
        sampled = jnp.stack([s0, s1], axis=0)                    # (2, 1, Np)
        return state + sampled

    for bi in range(bb):
        # Carry the flat field as a value across all nsteps (no per-step VMEM
        # round trips); fori_loop keeps code size / live ranges bounded.
        state0 = vec_ref[bi].astype(jnp.float32) * scale          # (2, 1, Np)
        state = jax.lax.fori_loop(0, nsteps, step, state0)
        out_ref[bi] = state


def vecint_pallas(vec_nchw, nsteps, *, sample_dtype=jnp.bfloat16, precision=None,
                  batch_block=None, lane_multiple=128):
    """vec_nchw: (B, 2, H, W) float32 flow field (channel 0 = dy, channel 1 = dx)."""
    B, C, H, W = vec_nchw.shape
    assert C == 2, "VecInt kernel expects a 2-channel (dy, dx) 2-D flow field"
    assert nsteps >= 0
    N = H * W
    Np = ((N + lane_multiple - 1) // lane_multiple) * lane_multiple
    scale = 1.0 / (2 ** nsteps)

    # NCHW -> (B, 2, 1, Np): pure reshape + lane padding (no transposes); spatial
    # pixels land on the lane axis so per-pixel math in the kernel is lane-dense.
    v = vec_nchw.reshape(B, 2, N).astype(jnp.float32)
    if Np != N:
        v = jnp.pad(v, ((0, 0), (0, 0), (0, Np - N)))
    v = v.reshape(B, 2, 1, Np)

    # Constant query coordinates (padded pixels map outside the image -> their
    # bilinear weights are fully masked to zero inside the kernel).
    flat = jnp.arange(Np, dtype=jnp.int32)
    coords = jnp.stack([(flat // W).astype(jnp.float32),
                        (flat % W).astype(jnp.float32)], axis=0).reshape(2, 1, Np)

    if batch_block is None:
        # Keep >= 2 grid steps when the batch allows it (v7x has two TensorCores
        # and batch is the only parallel axis); otherwise fold batch elements
        # together to amortize per-grid-step overhead at small field sizes.
        bb = B if B < 2 else max(1, B // 2)
        per_elem_bytes = 2 * Np * 4
        cap = max(1, (8 * 1024 * 1024) // (2 * 2 * per_elem_bytes))
        bb = min(bb, cap)
        while B % bb:
            bb -= 1
        batch_block = bb
    assert B % batch_block == 0

    # VMEM budget from the actual working set (double-buffered in/out blocks +
    # coords + image scratch + per-step temporaries), 2x headroom, capped well
    # under v7x's 64 MiB physical VMEM.
    block_bytes = batch_block * 2 * Np * 4
    coords_bytes = 2 * Np * 4
    scratch_bytes = 2 * H * W * 4
    temp_bytes = (4 * H + 3 * W) * Np * 4
    vmem_need = 2 * (2 * block_bytes + coords_bytes) + scratch_bytes + temp_bytes
    vmem_limit = int(min(56 * 1024 * 1024, max(16 * 1024 * 1024, 2 * vmem_need)))

    kernel = functools.partial(
        _vecint_kernel, H=H, W=W, nsteps=nsteps, scale=scale,
        sample_dtype=sample_dtype, precision=precision)

    out = pl.pallas_call(
        kernel,
        out_shape=jax.ShapeDtypeStruct((B, 2, 1, Np), jnp.float32),
        grid_spec=pltpu.PrefetchScalarGridSpec(
            num_scalar_prefetch=0,
            grid=(B // batch_block,),
            in_specs=[
                pl.BlockSpec((batch_block, 2, 1, Np), lambda b: (b, 0, 0, 0)),
                pl.BlockSpec((2, 1, Np), lambda b: (0, 0, 0)),
            ],
            out_specs=pl.BlockSpec((batch_block, 2, 1, Np), lambda b: (b, 0, 0, 0)),
            scratch_shapes=[pltpu.VMEM((2, H, W), jnp.float32)],
        ),
        compiler_params=pltpu.CompilerParams(
            dimension_semantics=("parallel",),
            vmem_limit_bytes=vmem_limit,
        ),
        input_output_aliases={0: 0},
    )(v, coords)

    return out.reshape(B, 2, Np)[:, :, :N].reshape(B, 2, H, W)


def vecint_reference(vec, nsteps):
    """Pure-JAX f32 reference mirroring VecInt / SpatialTransformer semantics."""
    B, C, H, W = vec.shape
    scale = 1.0 / (2 ** nsteps)
    v = vec * scale
    ii = jnp.arange(H, dtype=jnp.float32)[:, None] * jnp.ones((1, W), jnp.float32)
    jj = jnp.ones((H, 1), jnp.float32) * jnp.arange(W, dtype=jnp.float32)[None, :]
    for _ in range(nsteps):
        y = ii[None] + v[:, 0]
        x = jj[None] + v[:, 1]
        y0 = jnp.floor(y)
        x0 = jnp.floor(x)
        wy1 = y - y0
        wx1 = x - x0
        v_flat = v.reshape(B, 2, H * W)
        sampled = jnp.zeros_like(v)
        for dy, wy in ((0, 1 - wy1), (1, wy1)):
            for dx, wx in ((0, 1 - wx1), (1, wx1)):
                yc = y0 + dy
                xc = x0 + dx
                valid = (yc >= 0) & (yc <= H - 1) & (xc >= 0) & (xc <= W - 1)
                w = jnp.where(valid, wy * wx, 0.0)
                yci = jnp.clip(yc, 0, H - 1).astype(jnp.int32)
                xci = jnp.clip(xc, 0, W - 1).astype(jnp.int32)
                idx = (yci * W + xci).reshape(B, 1, H * W)
                g = jnp.take_along_axis(
                    v_flat, jnp.broadcast_to(idx, (B, 2, H * W)), axis=2)
                sampled = sampled + w[:, None, :, :] * g.reshape(B, 2, H, W)
        v = v + sampled
    return v


if __name__ == "__main__":
    key = jax.random.PRNGKey(0)
    k_a, k_c = jax.random.split(key)

    # Config A: 16x16 field, strict f32 MXU path, 2 batch elements folded into a
    # single grid step (batch_block=2) -> tight tolerance validates the algorithm.
    B, C, H, W = 2, 2, 16, 16
    nsteps = 4
    vec = jax.random.normal(k_a, (B, C, H, W), dtype=jnp.float32)
    ref = vecint_reference(vec, nsteps)

    strict = jax.jit(functools.partial(
        vecint_pallas, nsteps=nsteps, sample_dtype=jnp.float32,
        precision=jax.lax.Precision.HIGHEST, batch_block=2))
    out_f32 = jax.block_until_ready(strict(vec))
    assert out_f32.shape == (B, C, H, W)
    err_f32 = float(jnp.max(jnp.abs(out_f32 - ref)))
    assert jnp.allclose(out_f32, ref, atol=1e-4, rtol=1e-4), err_f32

    # Config B: default fast path (bf16 MXU operands, f32 accumulation), auto
    # batch_block (grid length 2 so both v7x TensorCores get a block).
    fast = jax.jit(functools.partial(vecint_pallas, nsteps=nsteps))
    out_fast = jax.block_until_ready(fast(vec))
    assert out_fast.shape == (B, C, H, W)
    err_fast = float(jnp.max(jnp.abs(out_fast - ref)))
    assert err_fast < 5e-2, err_fast

    # Config C: non-lane-multiple field (8x12 -> N=96 padded to 128) exercises
    # the lane-padding path; strict precision keeps the check tight.
    B2, H2, W2, nsteps2 = 2, 8, 12, 3
    vec2 = jax.random.normal(k_c, (B2, 2, H2, W2), dtype=jnp.float32)
    ref2 = vecint_reference(vec2, nsteps2)
    strict2 = jax.jit(functools.partial(
        vecint_pallas, nsteps=nsteps2, sample_dtype=jnp.float32,
        precision=jax.lax.Precision.HIGHEST))
    out2 = jax.block_until_ready(strict2(vec2))
    assert out2.shape == (B2, 2, H2, W2)
    err2 = float(jnp.max(jnp.abs(out2 - ref2)))
    assert jnp.allclose(out2, ref2, atol=1e-4, rtol=1e-4), err2

    print("KERNEL_OK")
</pallas_src>

<mosaic_0001>
module attributes {stable_mosaic.version = 11 : i64} {
  func.func @_vecint_kernel(%arg0: i32, %arg1: memref<2x2x1x256xf32, #tpu.memory_space<vmem>>, %arg2: memref<2x1x256xf32, #tpu.memory_space<vmem>>, %arg3: memref<2x2x1x256xf32, #tpu.memory_space<vmem>>, %arg4: memref<2x16x16xf32, #tpu.memory_space<vmem>>) attributes {dimension_semantics = [#tpu.dimension_semantics<parallel>], iteration_bounds = array<i64: 1>, scalar_prefetch = 0 : i64, scratch_operands = 1 : i64, tpu.core_type = #tpu.core_type<tc>, window_params = [{transform_indices = @transform_0, window_bounds = array<i64: 2, 2, 1, 256>}, {pipeline_mode = #tpu.pipeline_mode<synchronous>, transform_indices = @transform_1, window_bounds = array<i64: 2, 1, 256>}, {transform_indices = @transform_2, window_bounds = array<i64: 2, 2, 1, 256>}]} {
    %c0 = arith.constant 0 : index
    %c0_0 = arith.constant 0 : index
    %c0_1 = arith.constant 0 : index
    %0 = vector.load %arg2[%c0, %c0_0, %c0_1] : memref<2x1x256xf32, #tpu.memory_space<vmem>>, vector<1x1x256xf32>
    %1 = vector.shape_cast %0 : vector<1x1x256xf32> to vector<1x256xf32>
    %c1 = arith.constant 1 : index
    %c0_2 = arith.constant 0 : index
    %c0_3 = arith.constant 0 : index
    %2 = vector.load %arg2[%c1, %c0_2, %c0_3] : memref<2x1x256xf32, #tpu.memory_space<vmem>>, vector<1x1x256xf32>
    %3 = vector.shape_cast %2 : vector<1x1x256xf32> to vector<1x256xf32>
    %4 = tpu.iota {dimensions = array<i32: 0>} : vector<16x256xi32>
    %5 = tpu.iota {dimensions = array<i32: 0>} : vector<16x256xi32>
    %c0_4 = arith.constant 0 : index
    %c0_5 = arith.constant 0 : index
    %c0_6 = arith.constant 0 : index
    %c0_7 = arith.constant 0 : index
    %6 = vector.load %arg1[%c0_4, %c0_5, %c0_6, %c0_7] : memref<2x2x1x256xf32, #tpu.memory_space<vmem>>, vector<1x2x1x256xf32>
    %7 = vector.shape_cast %6 : vector<1x2x1x256xf32> to vector<2x1x256xf32>
    %cst = arith.constant 6.250000e-02 : f32
    %8 = vector.broadcast %cst : f32 to vector<2x1x256xf32>
    %9 = arith.mulf %7, %8 : vector<2x1x256xf32>
    %c0_i32 = arith.constant 0 : i32
    %c4_i32 = arith.constant 4 : i32
    %10 = arith.addi %c0_i32, %c4_i32 : i32
    %c1_i32 = arith.constant 1 : i32
    %11 = scf.for %arg5 = %c0_i32 to %10 step %c1_i32 iter_args(%arg6 = %9) -> (vector<2x1x256xf32>)  : i32 {
      %24 = vector.extract_strided_slice %arg6 {offsets = [0, 0, 0], sizes = [2, 1, 16], strides = [1, 1, 1]} : vector<2x1x256xf32> to vector<2x1x16xf32>
      %c0_24 = arith.constant 0 : index
      %c0_25 = arith.constant 0 : index
      %c0_26 = arith.constant 0 : index
      %25 = vector.load %arg4[%c0_24, %c0_25, %c0_26] : memref<2x16x16xf32, #tpu.memory_space<vmem>>, vector<2x1x16xf32>
      tpu.vector_store %arg4[%c0_24, %c0_25, %c0_26], %24 {strides = array<i32>} : memref<2x16x16xf32, #tpu.memory_space<vmem>>, vector<2x1x16xf32>,
      %26 = vector.extract_strided_slice %arg6 {offsets = [0, 0, 16], sizes = [2, 1, 16], strides = [1, 1, 1]} : vector<2x1x256xf32> to vector<2x1x16xf32>
      %c0_27 = arith.constant 0 : index
      %c1_28 = arith.constant 1 : index
      %c0_29 = arith.constant 0 : index
      %27 = vector.load %arg4[%c0_27, %c1_28, %c0_29] : memref<2x16x16xf32, #tpu.memory_space<vmem>>, vector<2x1x16xf32>
      tpu.vector_store %arg4[%c0_27, %c1_28, %c0_29], %26 {strides = array<i32>} : memref<2x16x16xf32, #tpu.memory_space<vmem>>, vector<2x1x16xf32>,
      %28 = vector.extract_strided_slice %arg6 {offsets = [0, 0, 32], sizes = [2, 1, 16], strides = [1, 1, 1]} : vector<2x1x256xf32> to vector<2x1x16xf32>
      %c0_30 = arith.constant 0 : index
      %c2 = arith.constant 2 : index
      %c0_31 = arith.constant 0 : index
      %29 = vector.load %arg4[%c0_30, %c2, %c0_31] : memref<2x16x16xf32, #tpu.memory_space<vmem>>, vector<2x1x16xf32>
      tpu.vector_store %arg4[%c0_30, %c2, %c0_31], %28 {strides = array<i32>} : memref<2x16x16xf32, #tpu.memory_space<vmem>>, vector<2x1x16xf32>,
      %30 = vector.extract_strided_slice %arg6 {offsets = [0, 0, 48], sizes = [2, 1, 16], strides = [1, 1, 1]} : vector<2x1x256xf32> to vector<2x1x16xf32>
      %c0_32 = arith.constant 0 : index
      %c3 = arith.constant 3 : index
      %c0_33 = arith.constant 0 : index
      %31 = vector.load %arg4[%c0_32, %c3, %c0_33] : memref<2x16x16xf32, #tpu.memory_space<vmem>>, vector<2x1x16xf32>
      tpu.vector_store %arg4[%c0_32, %c3, %c0_33], %30 {strides = array<i32>} : memref<2x16x16xf32, #tpu.memory_space<vmem>>, vector<2x1x16xf32>,
      %32 = vector.extract_strided_slice %arg6 {offsets = [0, 0, 64], sizes = [2, 1, 16], strides = [1, 1, 1]} : vector<2x1x256xf32> to vector<2x1x16xf32>
      %c0_34 = arith.constant 0 : index
      %c4 = arith.constant 4 : index
      %c0_35 = arith.constant 0 : index
      %33 = vector.load %arg4[%c0_34, %c4, %c0_35] : memref<2x16x16xf32, #tpu.memory_space<vmem>>, vector<2x1x16xf32>
      tpu.vector_store %arg4[%c0_34, %c4, %c0_35], %32 {strides = array<i32>} : memref<2x16x16xf32, #tpu.memory_space<vmem>>, vector<2x1x16xf32>,
      %34 = vector.extract_strided_slice %arg6 {offsets = [0, 0, 80], sizes = [2, 1, 16], strides = [1, 1, 1]} : vector<2x1x256xf32> to vector<2x1x16xf32>
      %c0_36 = arith.constant 0 : index
      %c5 = arith.constant 5 : index
      %c0_37 = arith.constant 0 : index
      %35 = vector.load %arg4[%c0_36, %c5, %c0_37] : memref<2x16x16xf32, #tpu.memory_space<vmem>>, vector<2x1x16xf32>
      tpu.vector_store %arg4[%c0_36, %c5, %c0_37], %34 {strides = array<i32>} : memref<2x16x16xf32, #tpu.memory_space<vmem>>, vector<2x1x16xf32>,
      %36 = vector.extract_strided_slice %arg6 {offsets = [0, 0, 96], sizes = [2, 1, 16], strides = [1, 1, 1]} : vector<2x1x256xf32> to vector<2x1x16xf32>
      %c0_38 = arith.constant 0 : index
      %c6 = arith.constant 6 : index
      %c0_39 = arith.constant 0 : index
      %37 = vector.load %arg4[%c0_38, %c6, %c0_39] : memref<2x16x16xf32, #tpu.memory_space<vmem>>, vector<2x1x16xf32>
      tpu.vector_store %arg4[%c0_38, %c6, %c0_39], %36 {strides = array<i32>} : memref<2x16x16xf32, #tpu.memory_space<vmem>>, vector<2x1x16xf32>,
      %38 = vector.extract_strided_slice %arg6 {offsets = [0, 0, 112], sizes = [2, 1, 16], strides = [1, 1, 1]} : vector<2x1x256xf32> to vector<2x1x16xf32>
      %c0_40 = arith.constant 0 : index
      %c7 = arith.constant 7 : index
      %c0_41 = arith.constant 0 : index
      %39 = vector.load %arg4[%c0_40, %c7, %c0_41] : memref<2x16x16xf32, #tpu.memory_space<vmem>>, vector<2x1x16xf32>
      tpu.vector_store %arg4[%c0_40, %c7, %c0_41], %38 {strides = array<i32>} : memref<2x16x16xf32, #tpu.memory_space<vmem>>, vector<2x1x16xf32>,
      %40 = vector.extract_strided_slice %arg6 {offsets = [0, 0, 128], sizes = [2, 1, 16], strides = [1, 1, 1]} : vector<2x1x256xf32> to vector<2x1x16xf32>
      %c0_42 = arith.constant 0 : index
      %c8 = arith.constant 8 : index
      %c0_43 = arith.constant 0 : index
      %41 = vector.load %arg4[%c0_42, %c8, %c0_43] : memref<2x16x16xf32, #tpu.memory_space<vmem>>, vector<2x1x16xf32>
      tpu.vector_store %arg4[%c0_42, %c8, %c0_43], %40 {strides = array<i32>} : memref<2x16x16xf32, #tpu.memory_space<vmem>>, vector<2x1x16xf32>,
      %42 = vector.extract_strided_slice %arg6 {offsets = [0, 0, 144], sizes = [2, 1, 16], strides = [1, 1, 1]} : vector<2x1x256xf32> to vector<2x1x16xf32>
      %c0_44 = arith.constant 0 : index
      %c9 = arith.constant 9 : index
      %c0_45 = arith.constant 0 : index
      %43 = vector.load %arg4[%c0_44, %c9, %c0_45] : memref<2x16x16xf32, #tpu.memory_space<vmem>>, vector<2x1x16xf32>
      tpu.vector_store %arg4[%c0_44, %c9, %c0_45], %42 {strides = array<i32>} : memref<2x16x16xf32, #tpu.memory_space<vmem>>, vector<2x1x16xf32>,
      %44 = vector.extract_strided_slice %arg6 {offsets = [0, 0, 160], sizes = [2, 1, 16], strides = [1, 1, 1]} : vector<2x1x256xf32> to vector<2x1x16xf32>
      %c0_46 = arith.constant 0 : index
      %c10 = arith.constant 10 : index
      %c0_47 = arith.constant 0 : index
      %45 = vector.load %arg4[%c0_46, %c10, %c0_47] : memref<2x16x16xf32, #tpu.memory_space<vmem>>, vector<2x1x16xf32>
      tpu.vector_store %arg4[%c0_46, %c10, %c0_47], %44 {strides = array<i32>} : memref<2x16x16xf32, #tpu.memory_space<vmem>>, vector<2x1x16xf32>,
      %46 = vector.extract_strided_slice %arg6 {offsets = [0, 0, 176], sizes = [2, 1, 16], strides = [1, 1, 1]} : vector<2x1x256xf32> to vector<2x1x16xf32>
      %c0_48 = arith.constant 0 : index
      %c11 = arith.constant 11 : index
      %c0_49 = arith.constant 0 : index
      %47 = vector.load %arg4[%c0_48, %c11, %c0_49] : memref<2x16x16xf32, #tpu.memory_space<vmem>>, vector<2x1x16xf32>
      tpu.vector_store %arg4[%c0_48, %c11, %c0_49], %46 {strides = array<i32>} : memref<2x16x16xf32, #tpu.memory_space<vmem>>, vector<2x1x16xf32>,
      %48 = vector.extract_strided_slice %arg6 {offsets = [0, 0, 192], sizes = [2, 1, 16], strides = [1, 1, 1]} : vector<2x1x256xf32> to vector<2x1x16xf32>
      %c0_50 = arith.constant 0 : index
      %c12 = arith.constant 12 : index
      %c0_51 = arith.constant 0 : index
      %49 = vector.load %arg4[%c0_50, %c12, %c0_51] : memref<2x16x16xf32, #tpu.memory_space<vmem>>, vector<2x1x16xf32>
      tpu.vector_store %arg4[%c0_50, %c12, %c0_51], %48 {strides = array<i32>} : memref<2x16x16xf32, #tpu.memory_space<vmem>>, vector<2x1x16xf32>,
      %50 = vector.extract_strided_slice %arg6 {offsets = [0, 0, 208], sizes = [2, 1, 16], strides = [1, 1, 1]} : vector<2x1x256xf32> to vector<2x1x16xf32>
      %c0_52 = arith.constant 0 : index
      %c13 = arith.constant 13 : index
      %c0_53 = arith.constant 0 : index
      %51 = vector.load %arg4[%c0_52, %c13, %c0_53] : memref<2x16x16xf32, #tpu.memory_space<vmem>>, vector<2x1x16xf32>
      tpu.vector_store %arg4[%c0_52, %c13, %c0_53], %50 {strides = array<i32>} : memref<2x16x16xf32, #tpu.memory_space<vmem>>, vector<2x1x16xf32>,
      %52 = vector.extract_strided_slice %arg6 {offsets = [0, 0, 224], sizes = [2, 1, 16], strides = [1, 1, 1]} : vector<2x1x256xf32> to vector<2x1x16xf32>
      %c0_54 = arith.constant 0 : index
      %c14 = arith.constant 14 : index
      %c0_55 = arith.constant 0 : index
      %53 = vector.load %arg4[%c0_54, %c14, %c0_55] : memref<2x16x16xf32, #tpu.memory_space<vmem>>, vector<2x1x16xf32>
      tpu.vector_store %arg4[%c0_54, %c14, %c0_55], %52 {strides = array<i32>} : memref<2x16x16xf32, #tpu.memory_space<vmem>>, vector<2x1x16xf32>,
      %54 = vector.extract_strided_slice %arg6 {offsets = [0, 0, 240], sizes = [2, 1, 16], strides = [1, 1, 1]} : vector<2x1x256xf32> to vector<2x1x16xf32>
      %c0_56 = arith.constant 0 : index
      %c15 = arith.constant 15 : index
      %c0_57 = arith.constant 0 : index
      %55 = vector.load %arg4[%c0_56, %c15, %c0_57] : memref<2x16x16xf32, #tpu.memory_space<vmem>>, vector<2x1x16xf32>
      tpu.vector_store %arg4[%c0_56, %c15, %c0_57], %54 {strides = array<i32>} : memref<2x16x16xf32, #tpu.memory_space<vmem>>, vector<2x1x16xf32>,
      %56 = vector.extract_strided_slice %arg6 {offsets = [0, 0, 0], sizes = [1, 1, 256], strides = [1, 1, 1]} : vector<2x1x256xf32> to vector<1x1x256xf32>
      %57 = vector.shape_cast %56 : vector<1x1x256xf32> to vector<1x256xf32>
      %58 = vector.extract_strided_slice %arg6 {offsets = [1, 0, 0], sizes = [1, 1, 256], strides = [1, 1, 1]} : vector<2x1x256xf32> to vector<1x1x256xf32>
      %59 = vector.shape_cast %58 : vector<1x1x256xf32> to vector<1x256xf32>
      %60 = arith.addf %1, %57 : vector<1x256xf32>
      %61 = arith.addf %3, %59 : vector<1x256xf32>
      %62 = math.floor %60 : vector<1x256xf32>
      %63 = math.floor %61 : vector<1x256xf32>
      %64 = arith.subf %60, %62 : vector<1x256xf32>
      %65 = arith.subf %61, %63 : vector<1x256xf32>
      %66 = arith.fptosi %62 : vector<1x256xf32> to vector<1x256xi32>
      %67 = arith.fptosi %63 : vector<1x256xf32> to vector<1x256xi32>
      %c1_i32_58 = arith.constant 1 : i32
      %68 = vector.broadcast %c1_i32_58 : i32 to vector<1x256xi32>
      %69 = arith.addi %66, %68 : vector<1x256xi32>
      %c1_i32_59 = arith.constant 1 : i32
      %70 = vector.broadcast %c1_i32_59 : i32 to vector<1x256xi32>
      %71 = arith.addi %67, %70 : vector<1x256xi32>
      %c0_i32_60 = arith.constant 0 : i32
      %72 = vector.broadcast %c0_i32_60 : i32 to vector<1x256xi32>
      %73 = arith.cmpi sge, %66, %72 : vector<1x256xi32>
      %c16_i32 = arith.constant 16 : i32
      %74 = vector.broadcast %c16_i32 : i32 to vector<1x256xi32>
      %75 = arith.cmpi slt, %66, %74 : vector<1x256xi32>
      %76 = arith.andi %73, %75 : vector<1x256xi1>
      %cst_61 = arith.constant 1.000000e+00 : f32
      %77 = vector.broadcast %cst_61 : f32 to vector<1x256xf32>
      %78 = arith.subf %77, %64 : vector<1x256xf32>
      %cst_62 = arith.constant 0.000000e+00 : f32
      %79 = vector.broadcast %cst_62 : f32 to vector<1x256xf32>
      %80 = arith.select %76, %78, %79 : vector<1x256xi1>, vector<1x256xf32>
      %c0_i32_63 = arith.constant 0 : i32
      %81 = vector.broadcast %c0_i32_63 : i32 to vector<1x256xi32>
      %82 = arith.cmpi sge, %69, %81 : vector<1x256xi32>
      %c16_i32_64 = arith.constant 16 : i32
      %83 = vector.broadcast %c16_i32_64 : i32 to vector<1x256xi32>
      %84 = arith.cmpi slt, %69, %83 : vector<1x256xi32>
      %85 = arith.andi %82, %84 : vector<1x256xi1>
      %cst_65 = arith.constant 0.000000e+00 : f32
      %86 = vector.broadcast %cst_65 : f32 to vector<1x256xf32>
      %87 = arith.select %85, %64, %86 : vector<1x256xi1>, vector<1x256xf32>
      %c0_i32_66 = arith.constant 0 : i32
      %88 = vector.broadcast %c0_i32_66 : i32 to vector<1x256xi32>
      %89 = arith.cmpi sge, %67, %88 : vector<1x256xi32>
      %c16_i32_67 = arith.constant 16 : i32
      %90 = vector.broadcast %c16_i32_67 : i32 to vector<1x256xi32>
      %91 = arith.cmpi slt, %67, %90 : vector<1x256xi32>
      %92 = arith.andi %89, %91 : vector<1x256xi1>
      %cst_68 = arith.constant 1.000000e+00 : f32
      %93 = vector.broadcast %cst_68 : f32 to vector<1x256xf32>
      %94 = arith.subf %93, %65 : vector<1x256xf32>
      %cst_69 = arith.constant 0.000000e+00 : f32
      %95 = vector.broadcast %cst_69 : f32 to vector<1x256xf32>
      %96 = arith.select %92, %94, %95 : vector<1x256xi1>, vector<1x256xf32>
      %c0_i32_70 = arith.constant 0 : i32
      %97 = vector.broadcast %c0_i32_70 : i32 to vector<1x256xi32>
      %98 = arith.cmpi sge, %71, %97 : vector<1x256xi32>
      %c16_i32_71 = arith.constant 16 : i32
      %99 = vector.broadcast %c16_i32_71 : i32 to vector<1x256xi32>
      %100 = arith.cmpi slt, %71, %99 : vector<1x256xi32>
      %101 = arith.andi %98, %100 : vector<1x256xi1>
      %cst_72 = arith.constant 0.000000e+00 : f32
      %102 = vector.broadcast %cst_72 : f32 to vector<1x256xf32>
      %103 = arith.select %101, %65, %102 : vector<1x256xi1>, vector<1x256xf32>
      %104 = vector.broadcast %66 : vector<1x256xi32> to vector<16x256xi32>
      %105 = arith.cmpi eq, %4, %104 : vector<16x256xi32>
      %cst_73 = arith.constant 0.000000e+00 : f32
      %106 = vector.shape_cast %80 : vector<1x256xf32> to vector<1x256xf32>
      %107 = vector.broadcast %106 : vector<1x256xf32> to vector<16x256xf32>
      %108 = vector.broadcast %cst_73 : f32 to vector<16x256xf32>
      %109 = arith.select %105, %107, %108 : vector<16x256xi1>, vector<16x256xf32>
      %110 = vector.broadcast %69 : vector<1x256xi32> to vector<16x256xi32>
      %111 = arith.cmpi eq, %4, %110 : vector<16x256xi32>
      %cst_74 = arith.constant 0.000000e+00 : f32
      %112 = vector.shape_cast %87 : vector<1x256xf32> to vector<1x256xf32>
      %113 = vector.broadcast %112 : vector<1x256xf32> to vector<16x256xf32>
      %114 = vector.broadcast %cst_74 : f32 to vector<16x256xf32>
      %115 = arith.select %111, %113, %114 : vector<16x256xi1>, vector<16x256xf32>
      %116 = arith.addf %109, %115 : vector<16x256xf32>
      %117 = vector.broadcast %67 : vector<1x256xi32> to vector<16x256xi32>
      %118 = arith.cmpi eq, %5, %117 : vector<16x256xi32>
      %cst_75 = arith.constant 0.000000e+00 : f32
      %119 = vector.shape_cast %96 : vector<1x256xf32> to vector<1x256xf32>
      %120 = vector.broadcast %119 : vector<1x256xf32> to vector<16x256xf32>
      %121 = vector.broadcast %cst_75 : f32 to vector<16x256xf32>
      %122 = arith.select %118, %120, %121 : vector<16x256xi1>, vector<16x256xf32>
      %123 = vector.broadcast %71 : vector<1x256xi32> to vector<16x256xi32>
      %124 = arith.cmpi eq, %5, %123 : vector<16x256xi32>
      %cst_76 = arith.constant 0.000000e+00 : f32
      %125 = vector.shape_cast %103 : vector<1x256xf32> to vector<1x256xf32>
      %126 = vector.broadcast %125 : vector<1x256xf32> to vector<16x256xf32>
      %127 = vector.broadcast %cst_76 : f32 to vector<16x256xf32>
      %128 = arith.select %124, %126, %127 : vector<16x256xi1>, vector<16x256xf32>
      %129 = arith.addf %122, %128 : vector<16x256xf32>
      %c0_77 = arith.constant 0 : index
      %c0_78 = arith.constant 0 : index
      %c0_79 = arith.constant 0 : index
      %130 = vector.load %arg4[%c0_77, %c0_78, %c0_79] : memref<2x16x16xf32, #tpu.memory_space<vmem>>, vector<1x16x16xf32>
      %131 = vector.shape_cast %130 : vector<1x16x16xf32> to vector<16x16xf32>
      %c1_80 = arith.constant 1 : index
      %c0_81 = arith.constant 0 : index
      %c0_82 = arith.constant 0 : index
      %132 = vector.load %arg4[%c1_80, %c0_81, %c0_82] : memref<2x16x16xf32, #tpu.memory_space<vmem>>, vector<1x16x16xf32>
      %133 = vector.shape_cast %132 : vector<1x16x16xf32> to vector<16x16xf32>
      %134 = tpu.concatenate %131, %133 in 0 : vector<16x16xf32>, vector<16x16xf32> -> vector<32x16xf32>
      %cst_83 = arith.constant dense<0.000000e+00> : vector<32x256xf32>
      %135 = tpu.matmul %134, %129, %cst_83 {dimension_numbers = #tpu.dot_dimension_numbers<[1], [0], [0], [1], [0, 0, 1, 1], [], []>, precision = #tpu.contract_precision<fp32>} : vector<32x16xf32>, vector<16x256xf32>, vector<32x256xf32> -> vector<32x256xf32>
      %136 = vector.extract_strided_slice %135 {offsets = [0, 0], sizes = [16, 256], strides = [1, 1]} : vector<32x256xf32> to vector<16x256xf32>
      %137 = arith.mulf %116, %136 : vector<16x256xf32>
      %cst_84 = arith.constant dense<0.000000e+00> : vector<256xf32>
      %138 = vector.multi_reduction <add>, %137, %cst_84 [0] : vector<16x256xf32> to vector<256xf32>
      %139 = vector.shape_cast %138 : vector<256xf32> to vector<1x256xf32>
      %140 = vector.extract_strided_slice %135 {offsets = [16, 0], sizes = [16, 256], strides = [1, 1]} : vector<32x256xf32> to vector<16x256xf32>
      %141 = arith.mulf %116, %140 : vector<16x256xf32>
      %cst_85 = arith.constant dense<0.000000e+00> : vector<256xf32>
      %142 = vector.multi_reduction <add>, %141, %cst_85 [0] : vector<16x256xf32> to vector<256xf32>
      %143 = vector.shape_cast %142 : vector<256xf32> to vector<1x256xf32>
      %144 = vector.shape_cast %139 : vector<1x256xf32> to vector<1x1x256xf32>
      %145 = vector.shape_cast %143 : vector<1x256xf32> to vector<1x1x256xf32>
      %146 = tpu.concatenate %144, %145 in 0 : vector<1x1x256xf32>, vector<1x1x256xf32> -> vector<2x1x256xf32>
      %147 = arith.addf %arg6, %146 : vector<2x1x256xf32>
      scf.yield %147 : vector<2x1x256xf32>
    }
    %c0_8 = arith.constant 0 : index
    %c0_9 = arith.constant 0 : index
    %c0_10 = arith.constant 0 : index
    %c0_11 = arith.constant 0 : index
    %12 = vector.load %arg3[%c0_8, %c0_9, %c0_10, %c0_11] : memref<2x2x1x256xf32, #tpu.memory_space<vmem>>, vector<1x2x1x256xf32>
    %13 = vector.shape_cast %12 : vector<1x2x1x256xf32> to vector<2x1x256xf32>
    %14 = vector.shape_cast %11 : vector<2x1x256xf32> to vector<1x2x1x256xf32>
    tpu.vector_store %arg3[%c0_8, %c0_9, %c0_10, %c0_11], %14 {strides = array<i32>} : memref<2x2x1x256xf32, #tpu.memory_space<vmem>>, vector<1x2x1x256xf32>,
    %c1_12 = arith.constant 1 : index
    %c0_13 = arith.constant 0 : index
    %c0_14 = arith.constant 0 : index
    %c0_15 = arith.constant 0 : index
    %15 = vector.load %arg1[%c1_12, %c0_13, %c0_14, %c0_15] : memref<2x2x1x256xf32, #tpu.memory_space<vmem>>, vector<1x2x1x256xf32>
    %16 = vector.shape_cast %15 : vector<1x2x1x256xf32> to vector<2x1x256xf32>
    %cst_16 = arith.constant 6.250000e-02 : f32
    %17 = vector.broadcast %cst_16 : f32 to vector<2x1x256xf32>
    %18 = arith.mulf %16, %17 : vector<2x1x256xf32>
    %c0_i32_17 = arith.constant 0 : i32
    %c4_i32_18 = arith.constant 4 : i32
    %19 = arith.addi %c0_i32_17, %c4_i32_18 : i32
    %c1_i32_19 = arith.constant 1 : i32
    %20 = scf.for %arg5 = %c0_i32_17 to %19 step %c1_i32_19 iter_args(%arg6 = %18) -> (vector<2x1x256xf32>)  : i32 {
      %24 = vector.extract_strided_slice %arg6 {offsets = [0, 0, 0], sizes = [2, 1, 16], strides = [1, 1, 1]} : vector<2x1x256xf32> to vector<2x1x16xf32>
      %c0_24 = arith.constant 0 : index
      %c0_25 = arith.constant 0 : index
      %c0_26 = arith.constant 0 : index
      %25 = vector.load %arg4[%c0_24, %c0_25, %c0_26] : memref<2x16x16xf32, #tpu.memory_space<vmem>>, vector<2x1x16xf32>
      tpu.vector_store %arg4[%c0_24, %c0_25, %c0_26], %24 {strides = array<i32>} : memref<2x16x16xf32, #tpu.memory_space<vmem>>, vector<2x1x16xf32>,
      %26 = vector.extract_strided_slice %arg6 {offsets = [0, 0, 16], sizes = [2, 1, 16], strides = [1, 1, 1]} : vector<2x1x256xf32> to vector<2x1x16xf32>
      %c0_27 = arith.constant 0 : index
      %c1_28 = arith.constant 1 : index
      %c0_29 = arith.constant 0 : index
      %27 = vector.load %arg4[%c0_27, %c1_28, %c0_29] : memref<2x16x16xf32, #tpu.memory_space<vmem>>, vector<2x1x16xf32>
      tpu.vector_store %arg4[%c0_27, %c1_28, %c0_29], %26 {strides = array<i32>} : memref<2x16x16xf32, #tpu.memory_space<vmem>>, vector<2x1x16xf32>,
      %28 = vector.extract_strided_slice %arg6 {offsets = [0, 0, 32], sizes = [2, 1, 16], strides = [1, 1, 1]} : vector<2x1x256xf32> to vector<2x1x16xf32>
      %c0_30 = arith.constant 0 : index
      %c2 = arith.constant 2 : index
      %c0_31 = arith.constant 0 : index
      %29 = vector.load %arg4[%c0_30, %c2, %c0_31] : memref<2x16x16xf32, #tpu.memory_space<vmem>>, vector<2x1x16xf32>
      tpu.vector_store %arg4[%c0_30, %c2, %c0_31], %28 {strides = array<i32>} : memref<2x16x16xf32, #tpu.memory_space<vmem>>, vector<2x1x16xf32>,
      %30 = vector.extract_strided_slice %arg6 {offsets = [0, 0, 48], sizes = [2, 1, 16], strides = [1, 1, 1]} : vector<2x1x256xf32> to vector<2x1x16xf32>
      %c0_32 = arith.constant 0 : index
      %c3 = arith.constant 3 : index
      %c0_33 = arith.constant 0 : index
      %31 = vector.load %arg4[%c0_32, %c3, %c0_33] : memref<2x16x16xf32, #tpu.memory_space<vmem>>, vector<2x1x16xf32>
      tpu.vector_store %arg4[%c0_32, %c3, %c0_33], %30 {strides = array<i32>} : memref<2x16x16xf32, #tpu.memory_space<vmem>>, vector<2x1x16xf32>,
      %32 = vector.extract_strided_slice %arg6 {offsets = [0, 0, 64], sizes = [2, 1, 16], strides = [1, 1, 1]} : vector<2x1x256xf32> to vector<2x1x16xf32>
      %c0_34 = arith.constant 0 : index
      %c4 = arith.constant 4 : index
      %c0_35 = arith.constant 0 : index
      %33 = vector.load %arg4[%c0_34, %c4, %c0_35] : memref<2x16x16xf32, #tpu.memory_space<vmem>>, vector<2x1x16xf32>
      tpu.vector_store %arg4[%c0_34, %c4, %c0_35], %32 {strides = array<i32>} : memref<2x16x16xf32, #tpu.memory_space<vmem>>, vector<2x1x16xf32>,
      %34 = vector.extract_strided_slice %arg6 {offsets = [0, 0, 80], sizes = [2, 1, 16], strides = [1, 1, 1]} : vector<2x1x256xf32> to vector<2x1x16xf32>
      %c0_36 = arith.constant 0 : index
      %c5 = arith.constant 5 : index
      %c0_37 = arith.constant 0 : index
      %35 = vector.load %arg4[%c0_36, %c5, %c0_37] : memref<2x16x16xf32, #tpu.memory_space<vmem>>, vector<2x1x16xf32>
      tpu.vector_store %arg4[%c0_36, %c5, %c0_37], %34 {strides = array<i32>} : memref<2x16x16xf32, #tpu.memory_space<vmem>>, vector<2x1x16xf32>,
      %36 = vector.extract_strided_slice %arg6 {offsets = [0, 0, 96], sizes = [2, 1, 16], strides = [1, 1, 1]} : vector<2x1x256xf32> to vector<2x1x16xf32>
      %c0_38 = arith.constant 0 : index
      %c6 = arith.constant 6 : index
      %c0_39 = arith.constant 0 : index
      %37 = vector.load %arg4[%c0_38, %c6, %c0_39] : memref<2x16x16xf32, #tpu.memory_space<vmem>>, vector<2x1x16xf32>
      tpu.vector_store %arg4[%c0_38, %c6, %c0_39], %36 {strides = array<i32>} : memref<2x16x16xf32, #tpu.memory_space<vmem>>, vector<2x1x16xf32>,
      %38 = vector.extract_strided_slice %arg6 {offsets = [0, 0, 112], sizes = [2, 1, 16], strides = [1, 1, 1]} : vector<2x1x256xf32> to vector<2x1x16xf32>
      %c0_40 = arith.constant 0 : index
      %c7 = arith.constant 7 : index
      %c0_41 = arith.constant 0 : index
      %39 = vector.load %arg4[%c0_40, %c7, %c0_41] : memref<2x16x16xf32, #tpu.memory_space<vmem>>, vector<2x1x16xf32>
      tpu.vector_store %arg4[%c0_40, %c7, %c0_41], %38 {strides = array<i32>} : memref<2x16x16xf32, #tpu.memory_space<vmem>>, vector<2x1x16xf32>,
      %40 = vector.extract_strided_slice %arg6 {offsets = [0, 0, 128], sizes = [2, 1, 16], strides = [1, 1, 1]} : vector<2x1x256xf32> to vector<2x1x16xf32>
      %c0_42 = arith.constant 0 : index
      %c8 = arith.constant 8 : index
      %c0_43 = arith.constant 0 : index
      %41 = vector.load %arg4[%c0_42, %c8, %c0_43] : memref<2x16x16xf32, #tpu.memory_space<vmem>>, vector<2x1x16xf32>
      tpu.vector_store %arg4[%c0_42, %c8, %c0_43], %40 {strides = array<i32>} : memref<2x16x16xf32, #tpu.memory_space<vmem>>, vector<2x1x16xf32>,
      %42 = vector.extract_strided_slice %arg6 {offsets = [0, 0, 144], sizes = [2, 1, 16], strides = [1, 1, 1]} : vector<2x1x256xf32> to vector<2x1x16xf32>
      %c0_44 = arith.constant 0 : index
      %c9 = arith.constant 9 : index
      %c0_45 = arith.constant 0 : index
      %43 = vector.load %arg4[%c0_44, %c9, %c0_45] : memref<2x16x16xf32, #tpu.memory_space<vmem>>, vector<2x1x16xf32>
      tpu.vector_store %arg4[%c0_44, %c9, %c0_45], %42 {strides = array<i32>} : memref<2x16x16xf32, #tpu.memory_space<vmem>>, vector<2x1x16xf32>,
      %44 = vector.extract_strided_slice %arg6 {offsets = [0, 0, 160], sizes = [2, 1, 16], strides = [1, 1, 1]} : vector<2x1x256xf32> to vector<2x1x16xf32>
      %c0_46 = arith.constant 0 : index
      %c10 = arith.constant 10 : index
      %c0_47 = arith.constant 0 : index
      %45 = vector.load %arg4[%c0_46, %c10, %c0_47] : memref<2x16x16xf32, #tpu.memory_space<vmem>>, vector<2x1x16xf32>
      tpu.vector_store %arg4[%c0_46, %c10, %c0_47], %44 {strides = array<i32>} : memref<2x16x16xf32, #tpu.memory_space<vmem>>, vector<2x1x16xf32>,
      %46 = vector.extract_strided_slice %arg6 {offsets = [0, 0, 176], sizes = [2, 1, 16], strides = [1, 1, 1]} : vector<2x1x256xf32> to vector<2x1x16xf32>
      %c0_48 = arith.constant 0 : index
      %c11 = arith.constant 11 : index
      %c0_49 = arith.constant 0 : index
      %47 = vector.load %arg4[%c0_48, %c11, %c0_49] : memref<2x16x16xf32, #tpu.memory_space<vmem>>, vector<2x1x16xf32>
      tpu.vector_store %arg4[%c0_48, %c11, %c0_49], %46 {strides = array<i32>} : memref<2x16x16xf32, #tpu.memory_space<vmem>>, vector<2x1x16xf32>,
      %48 = vector.extract_strided_slice %arg6 {offsets = [0, 0, 192], sizes = [2, 1, 16], strides = [1, 1, 1]} : vector<2x1x256xf32> to vector<2x1x16xf32>
      %c0_50 = arith.constant 0 : index
      %c12 = arith.constant 12 : index
      %c0_51 = arith.constant 0 : index
      %49 = vector.load %arg4[%c0_50, %c12, %c0_51] : memref<2x16x16xf32, #tpu.memory_space<vmem>>, vector<2x1x16xf32>
      tpu.vector_store %arg4[%c0_50, %c12, %c0_51], %48 {strides = array<i32>} : memref<2x16x16xf32, #tpu.memory_space<vmem>>, vector<2x1x16xf32>,
      %50 = vector.extract_strided_slice %arg6 {offsets = [0, 0, 208], sizes = [2, 1, 16], strides = [1, 1, 1]} : vector<2x1x256xf32> to vector<2x1x16xf32>
      %c0_52 = arith.constant 0 : index
      %c13 = arith.constant 13 : index
      %c0_53 = arith.constant 0 : index
      %51 = vector.load %arg4[%c0_52, %c13, %c0_53] : memref<2x16x16xf32, #tpu.memory_space<vmem>>, vector<2x1x16xf32>
      tpu.vector_store %arg4[%c0_52, %c13, %c0_53], %50 {strides = array<i32>} : memref<2x16x16xf32, #tpu.memory_space<vmem>>, vector<2x1x16xf32>,
      %52 = vector.extract_strided_slice %arg6 {offsets = [0, 0, 224], sizes = [2, 1, 16], strides = [1, 1, 1]} : vector<2x1x256xf32> to vector<2x1x16xf32>
      %c0_54 = arith.constant 0 : index
      %c14 = arith.constant 14 : index
      %c0_55 = arith.constant 0 : index
      %53 = vector.load %arg4[%c0_54, %c14, %c0_55] : memref<2x16x16xf32, #tpu.memory_space<vmem>>, vector<2x1x16xf32>
      tpu.vector_store %arg4[%c0_54, %c14, %c0_55], %52 {strides = array<i32>} : memref<2x16x16xf32, #tpu.memory_space<vmem>>, vector<2x1x16xf32>,
      %54 = vector.extract_strided_slice %arg6 {offsets = [0, 0, 240], sizes = [2, 1, 16], strides = [1, 1, 1]} : vector<2x1x256xf32> to vector<2x1x16xf32>
      %c0_56 = arith.constant 0 : index
      %c15 = arith.constant 15 : index
      %c0_57 = arith.constant 0 : index
      %55 = vector.load %arg4[%c0_56, %c15, %c0_57] : memref<2x16x16xf32, #tpu.memory_space<vmem>>, vector<2x1x16xf32>
      tpu.vector_store %arg4[%c0_56, %c15, %c0_57], %54 {strides = array<i32>} : memref<2x16x16xf32, #tpu.memory_space<vmem>>, vector<2x1x16xf32>,
      %56 = vector.extract_strided_slice %arg6 {offsets = [0, 0, 0], sizes = [1, 1, 256], strides = [1, 1, 1]} : vector<2x1x256xf32> to vector<1x1x256xf32>
      %57 = vector.shape_cast %56 : vector<1x1x256xf32> to vector<1x256xf32>
      %58 = vector.extract_strided_slice %arg6 {offsets = [1, 0, 0], sizes = [1, 1, 256], strides = [1, 1, 1]} : vector<2x1x256xf32> to vector<1x1x256xf32>
      %59 = vector.shape_cast %58 : vector<1x1x256xf32> to vector<1x256xf32>
      %60 = arith.addf %1, %57 : vector<1x256xf32>
      %61 = arith.addf %3, %59 : vector<1x256xf32>
      %62 = math.floor %60 : vector<1x256xf32>
      %63 = math.floor %61 : vector<1x256xf32>
      %64 = arith.subf %60, %62 : vector<1x256xf32>
      %65 = arith.subf %61, %63 : vector<1x256xf32>
      %66 = arith.fptosi %62 : vector<1x256xf32> to vector<1x256xi32>
      %67 = arith.fptosi %63 : vector<1x256xf32> to vector<1x256xi32>
      %c1_i32_58 = arith.constant 1 : i32
      %68 = vector.broadcast %c1_i32_58 : i32 to vector<1x256xi32>
      %69 = arith.addi %66, %68 : vector<1x256xi32>
      %c1_i32_59 = arith.constant 1 : i32
      %70 = vector.broadcast %c1_i32_59 : i32 to vector<1x256xi32>
      %71 = arith.addi %67, %70 : vector<1x256xi32>
      %c0_i32_60 = arith.constant 0 : i32
      %72 = vector.broadcast %c0_i32_60 : i32 to vector<1x256xi32>
      %73 = arith.cmpi sge, %66, %72 : vector<1x256xi32>
      %c16_i32 = arith.constant 16 : i32
      %74 = vector.broadcast %c16_i32 : i32 to vector<1x256xi32>
      %75 = arith.cmpi slt, %66, %74 : vector<1x256xi32>
      %76 = arith.andi %73, %75 : vector<1x256xi1>
      %cst_61 = arith.constant 1.000000e+00 : f32
      %77 = vector.broadcast %cst_61 : f32 to vector<1x256xf32>
      %78 = arith.subf %77, %64 : vector<1x256xf32>
      %cst_62 = arith.constant 0.000000e+00 : f32
      %79 = vector.broadcast %cst_62 : f32 to vector<1x256xf32>
      %80 = arith.select %76, %78, %79 : vector<1x256xi1>, vector<1x256xf32>
      %c0_i32_63 = arith.constant 0 : i32
      %81 = vector.broadcast %c0_i32_63 : i32 to vector<1x256xi32>
      %82 = arith.cmpi sge, %69, %81 : vector<1x256xi32>
      %c16_i32_64 = arith.constant 16 : i32
      %83 = vector.broadcast %c16_i32_64 : i32 to vector<1x256xi32>
      %84 = arith.cmpi slt, %69, %83 : vector<1x256xi32>
      %85 = arith.andi %82, %84 : vector<1x256xi1>
      %cst_65 = arith.constant 0.000000e+00 : f32
      %86 = vector.broadcast %cst_65 : f32 to vector<1x256xf32>
      %87 = arith.select %85, %64, %86 : vector<1x256xi1>, vector<1x256xf32>
      %c0_i32_66 = arith.constant 0 : i32
      %88 = vector.broadcast %c0_i32_66 : i32 to vector<1x256xi32>
      %89 = arith.cmpi sge, %67, %88 : vector<1x256xi32>
      %c16_i32_67 = arith.constant 16 : i32
      %90 = vector.broadcast %c16_i32_67 : i32 to vector<1x256xi32>
      %91 = arith.cmpi slt, %67, %90 : vector<1x256xi32>
      %92 = arith.andi %89, %91 : vector<1x256xi1>
      %cst_68 = arith.constant 1.000000e+00 : f32
      %93 = vector.broadcast %cst_68 : f32 to vector<1x256xf32>
      %94 = arith.subf %93, %65 : vector<1x256xf32>
      %cst_69 = arith.constant 0.000000e+00 : f32
      %95 = vector.broadcast %cst_69 : f32 to vector<1x256xf32>
      %96 = arith.select %92, %94, %95 : vector<1x256xi1>, vector<1x256xf32>
      %c0_i32_70 = arith.constant 0 : i32
      %97 = vector.broadcast %c0_i32_70 : i32 to vector<1x256xi32>
      %98 = arith.cmpi sge, %71, %97 : vector<1x256xi32>
      %c16_i32_71 = arith.constant 16 : i32
      %99 = vector.broadcast %c16_i32_71 : i32 to vector<1x256xi32>
      %100 = arith.cmpi slt, %71, %99 : vector<1x256xi32>
      %101 = arith.andi %98, %100 : vector<1x256xi1>
      %cst_72 = arith.constant 0.000000e+00 : f32
      %102 = vector.broadcast %cst_72 : f32 to vector<1x256xf32>
      %103 = arith.select %101, %65, %102 : vector<1x256xi1>, vector<1x256xf32>
      %104 = vector.broadcast %66 : vector<1x256xi32> to vector<16x256xi32>
      %105 = arith.cmpi eq, %4, %104 : vector<16x256xi32>
      %cst_73 = arith.constant 0.000000e+00 : f32
      %106 = vector.shape_cast %80 : vector<1x256xf32> to vector<1x256xf32>
      %107 = vector.broadcast %106 : vector<1x256xf32> to vector<16x256xf32>
      %108 = vector.broadcast %cst_73 : f32 to vector<16x256xf32>
      %109 = arith.select %105, %107, %108 : vector<16x256xi1>, vector<16x256xf32>
      %110 = vector.broadcast %69 : vector<1x256xi32> to vector<16x256xi32>
      %111 = arith.cmpi eq, %4, %110 : vector<16x256xi32>
      %cst_74 = arith.constant 0.000000e+00 : f32
      %112 = vector.shape_cast %87 : vector<1x256xf32> to vector<1x256xf32>
      %113 = vector.broadcast %112 : vector<1x256xf32> to vector<16x256xf32>
      %114 = vector.broadcast %cst_74 : f32 to vector<16x256xf32>
      %115 = arith.select %111, %113, %114 : vector<16x256xi1>, vector<16x256xf32>
      %116 = arith.addf %109, %115 : vector<16x256xf32>
      %117 = vector.broadcast %67 : vector<1x256xi32> to vector<16x256xi32>
      %118 = arith.cmpi eq, %5, %117 : vector<16x256xi32>
      %cst_75 = arith.constant 0.000000e+00 : f32
      %119 = vector.shape_cast %96 : vector<1x256xf32> to vector<1x256xf32>
      %120 = vector.broadcast %119 : vector<1x256xf32> to vector<16x256xf32>
      %121 = vector.broadcast %cst_75 : f32 to vector<16x256xf32>
      %122 = arith.select %118, %120, %121 : vector<16x256xi1>, vector<16x256xf32>
      %123 = vector.broadcast %71 : vector<1x256xi32> to vector<16x256xi32>
      %124 = arith.cmpi eq, %5, %123 : vector<16x256xi32>
      %cst_76 = arith.constant 0.000000e+00 : f32
      %125 = vector.shape_cast %103 : vector<1x256xf32> to vector<1x256xf32>
      %126 = vector.broadcast %125 : vector<1x256xf32> to vector<16x256xf32>
      %127 = vector.broadcast %cst_76 : f32 to vector<16x256xf32>
      %128 = arith.select %124, %126, %127 : vector<16x256xi1>, vector<16x256xf32>
      %129 = arith.addf %122, %128 : vector<16x256xf32>
      %c0_77 = arith.constant 0 : index
      %c0_78 = arith.constant 0 : index
      %c0_79 = arith.constant 0 : index
      %130 = vector.load %arg4[%c0_77, %c0_78, %c0_79] : memref<2x16x16xf32, #tpu.memory_space<vmem>>, vector<1x16x16xf32>
      %131 = vector.shape_cast %130 : vector<1x16x16xf32> to vector<16x16xf32>
      %c1_80 = arith.constant 1 : index
      %c0_81 = arith.constant 0 : index
      %c0_82 = arith.constant 0 : index
      %132 = vector.load %arg4[%c1_80, %c0_81, %c0_82] : memref<2x16x16xf32, #tpu.memory_space<vmem>>, vector<1x16x16xf32>
      %133 = vector.shape_cast %132 : vector<1x16x16xf32> to vector<16x16xf32>
      %134 = tpu.concatenate %131, %133 in 0 : vector<16x16xf32>, vector<16x16xf32> -> vector<32x16xf32>
      %cst_83 = arith.constant dense<0.000000e+00> : vector<32x256xf32>
      %135 = tpu.matmul %134, %129, %cst_83 {dimension_numbers = #tpu.dot_dimension_numbers<[1], [0], [0], [1], [0, 0, 1, 1], [], []>, precision = #tpu.contract_precision<fp32>} : vector<32x16xf32>, vector<16x256xf32>, vector<32x256xf32> -> vector<32x256xf32>
      %136 = vector.extract_strided_slice %135 {offsets = [0, 0], sizes = [16, 256], strides = [1, 1]} : vector<32x256xf32> to vector<16x256xf32>
      %137 = arith.mulf %116, %136 : vector<16x256xf32>
      %cst_84 = arith.constant dense<0.000000e+00> : vector<256xf32>
      %138 = vector.multi_reduction <add>, %137, %cst_84 [0] : vector<16x256xf32> to vector<256xf32>
      %139 = vector.shape_cast %138 : vector<256xf32> to vector<1x256xf32>
      %140 = vector.extract_strided_slice %135 {offsets = [16, 0], sizes = [16, 256], strides = [1, 1]} : vector<32x256xf32> to vector<16x256xf32>
      %141 = arith.mulf %116, %140 : vector<16x256xf32>
      %cst_85 = arith.constant dense<0.000000e+00> : vector<256xf32>
      %142 = vector.multi_reduction <add>, %141, %cst_85 [0] : vector<16x256xf32> to vector<256xf32>
      %143 = vector.shape_cast %142 : vector<256xf32> to vector<1x256xf32>
      %144 = vector.shape_cast %139 : vector<1x256xf32> to vector<1x1x256xf32>
      %145 = vector.shape_cast %143 : vector<1x256xf32> to vector<1x1x256xf32>
      %146 = tpu.concatenate %144, %145 in 0 : vector<1x1x256xf32>, vector<1x1x256xf32> -> vector<2x1x256xf32>
      %147 = arith.addf %arg6, %146 : vector<2x1x256xf32>
      scf.yield %147 : vector<2x1x256xf32>
    }
    %c1_20 = arith.constant 1 : index
    %c0_21 = arith.constant 0 : index
    %c0_22 = arith.constant 0 : index
    %c0_23 = arith.constant 0 : index
    %21 = vector.load %arg3[%c1_20, %c0_21, %c0_22, %c0_23] : memref<2x2x1x256xf32, #tpu.memory_space<vmem>>, vector<1x2x1x256xf32>
    %22 = vector.shape_cast %21 : vector<1x2x1x256xf32> to vector<2x1x256xf32>
    %23 = vector.shape_cast %20 : vector<2x1x256xf32> to vector<1x2x1x256xf32>
    tpu.vector_store %arg3[%c1_20, %c0_21, %c0_22, %c0_23], %23 {strides = array<i32>} : memref<2x2x1x256xf32, #tpu.memory_space<vmem>>, vector<1x2x1x256xf32>,
    return
  }
  func.func @transform_0(%arg0: i32) -> (i32, i32, i32, i32) {
    %c0_i32 = arith.constant 0 : i32
    %c0_i32_0 = arith.constant 0 : i32
    %c0_i32_1 = arith.constant 0 : i32
    %c0_i32_2 = arith.constant 0 : i32
    return %arg0, %c0_i32, %c0_i32_0, %c0_i32_1 : i32, i32, i32, i32
  }
  func.func @transform_1(%arg0: i32) -> (i32, i32, i32) {
    %c0_i32 = arith.constant 0 : i32
    %c0_i32_0 = arith.constant 0 : i32
    %c0_i32_1 = arith.constant 0 : i32
    %c0_i32_2 = arith.constant 0 : i32
    return %c0_i32, %c0_i32_0, %c0_i32_1 : i32, i32, i32
  }
  func.func @transform_2(%arg0: i32) -> (i32, i32, i32, i32) {
    %c0_i32 = arith.constant 0 : i32
    %c0_i32_0 = arith.constant 0 : i32
    %c0_i32_1 = arith.constant 0 : i32
    %c0_i32_2 = arith.constant 0 : i32
    return %arg0, %c0_i32, %c0_i32_0, %c0_i32_1 : i32, i32, i32, i32
  }
}

</mosaic_0001>

<llo_original>
// kernel: vecint_pallas.1
$region0: #{vecint_pallas.1}
  #allocation0 [shape = 'u32[]', space=smem, size = 0x4, offset = 0x4, fixed_abs, tag = 'smem constant byte address 0x4 - core index']
  #allocation1 [shape = 'u32[72,128]{1,0:T(1,128)}', space=vmem, size = 0x9000, scoped, tag = 'internal scratch']
  #allocation2 [shape = 'f32[2,16,16]{2,1,0:T(8,128)}', space=vmem, size = 0x4000, scoped, tag = 'scratch operand']
  %s0 = inlined_call_operand.vmem [shape: f32[2,2,1,256], index: 0, kind: input, shape index: {}, may-alias: {0,2}]
  %s1 = inlined_call_operand.vmem [shape: f32[2,1,256], index: 1, kind: input, shape index: {}]
  %s2 = inlined_call_operand.vmem [shape: f32[2,2,1,256], index: 2, kind: output, shape index: {}, may-alias: {0,2}]
  %s3 = sld [smem:[#allocation0]]
  $region32: #{vecint_pallas.1} parent=0
    _
  %s5 = ssub.s32 1, %s3
  %s6 = scalar_select 0, %s5, %s3
  // Predicated region
  $region2: #{vecint_pallas.1} parent=0 // pred_check
    _
  $region3: #{vecint_pallas.1} parent=0 // pred_check_branch
    %8 = sbr.rel (0) target = $region5
  $region4: #{vecint_pallas.1} parent=0 // pred_region
    _
  $region5: #{vecint_pallas.1} parent=0 // pred_fallthru
    _
  // Predicated region
  $region6: #{vecint_pallas.1} parent=0 // pred_check
    _
  $region7: #{vecint_pallas.1} parent=0 // pred_check_branch
    %10 = sbr.rel (0) target = $region9
  $region8: #{vecint_pallas.1} parent=0 // pred_region
    _
  $region9: #{vecint_pallas.1} parent=0 // pred_fallthru
    _
  %v11 = vld [vmem:[%s1] sm:$0x3]
  %s12 = scalar_lea.vmem %s1, 2
  %v13 = vld [vmem:[%s12] sm:$0x3]
  %v14 = vlaneseq
  %v15 = vshrl.u32 %v14, 7
  %v16 = vadd.s32 %v15, 8
  %v17 = vld [vmem:[%s0] sm:$0x3]
  %v18 = vld [vmem:[%s0 + $0x2] sm:$0x3]
  %v19 = vmul.f32 %v17, 0.0625
  %v20 = vmul.f32 %v18, 0.0625
  loop: start=0, step=1, limit=4
  $region10: #{vecint_pallas.1} parent=0 // loop_pre_header
    _
  $region11: #{vecint_pallas.1} parent=0 // loop_header
    %s22 = sphi 0, %s26
    %p23 = scmp.ge.s32.totalorder %s22, 4
    %v27 = vphi %v19, %v819
    %v28 = vphi %v20, %v820
  $region12: #{vecint_pallas.1} parent=0 // loop_header_branch
    %25 = sbr.rel (%p23) target = $region16
  $region13: #{vecint_pallas.1} parent=0 // loop_body
    %vm29 = vcmask 122880
    %30 = vst.msk [vmem:[#allocation2] sm:$0x1] %vm29, %v27
    %31 = vst.msk [vmem:[#allocation2 + $0x10] sm:$0x1] %vm29, %v28
    %v34 = vperm.slane %v27, 0
    %v35 = vperm.slane %v28, 0
    %36 = vrot.lane.b32.xlu0 %v34, 112
    %v37 = vpop.permute.xlu0 %36
    %38 = vrot.lane.b32.xlu0 %v35, 112
    %v39 = vpop.permute.xlu0 %38
    %42 = vst.msk [vmem:[#allocation2 + $0x1] sm:$0x1] %vm29, %v37
    %43 = vst.msk [vmem:[#allocation2 + $0x11] sm:$0x1] %vm29, %v39
    %44 = vrot.lane.b32.xlu0 %v34, 96
    %v45 = vpop.permute.xlu0 %44
    %46 = vrot.lane.b32.xlu0 %v35, 96
    %v47 = vpop.permute.xlu0 %46
    %50 = vst.msk [vmem:[#allocation2 + $0x2] sm:$0x1] %vm29, %v45
    %51 = vst.msk [vmem:[#allocation2 + $0x12] sm:$0x1] %vm29, %v47
    %52 = vrot.lane.b32.xlu0 %v34, 80
    %v53 = vpop.permute.xlu0 %52
    %54 = vrot.lane.b32.xlu0 %v35, 80
    %v55 = vpop.permute.xlu0 %54
    %58 = vst.msk [vmem:[#allocation2 + $0x3] sm:$0x1] %vm29, %v53
    %59 = vst.msk [vmem:[#allocation2 + $0x13] sm:$0x1] %vm29, %v55
    %60 = vrot.lane.b32.xlu0 %v34, 64
    %v61 = vpop.permute.xlu0 %60
    %62 = vrot.lane.b32.xlu0 %v35, 64
    %v63 = vpop.permute.xlu0 %62
    %66 = vst.msk [vmem:[#allocation2 + $0x4] sm:$0x1] %vm29, %v61
    %67 = vst.msk [vmem:[#allocation2 + $0x14] sm:$0x1] %vm29, %v63
    %68 = vrot.lane.b32.xlu0 %v34, 48
    %v69 = vpop.permute.xlu0 %68
    %70 = vrot.lane.b32.xlu0 %v35, 48
    %v71 = vpop.permute.xlu0 %70
    %74 = vst.msk [vmem:[#allocation2 + $0x5] sm:$0x1] %vm29, %v69
    %75 = vst.msk [vmem:[#allocation2 + $0x15] sm:$0x1] %vm29, %v71
    %76 = vrot.lane.b32.xlu0 %v34, 32
    %v77 = vpop.permute.xlu0 %76
    %78 = vrot.lane.b32.xlu0 %v35, 32
    %v79 = vpop.permute.xlu0 %78
    %82 = vst.msk [vmem:[#allocation2 + $0x6] sm:$0x1] %vm29, %v77
    %83 = vst.msk [vmem:[#allocation2 + $0x16] sm:$0x1] %vm29, %v79
    %84 = vrot.lane.b32.xlu0 %v34, 16
    %v85 = vpop.permute.xlu0 %84
    %86 = vrot.lane.b32.xlu0 %v35, 16
    %v87 = vpop.permute.xlu0 %86
    %90 = vst.msk [vmem:[#allocation2 + $0x7] sm:$0x1] %vm29, %v85
    %91 = vst.msk [vmem:[#allocation2 + $0x17] sm:$0x1] %vm29, %v87
    %v92 = vperm.slane %v27, 1
    %v93 = vperm.slane %v28, 1
    %96 = vst.msk [vmem:[#allocation2 + $0x8] sm:$0x1] %vm29, %v92
    %97 = vst.msk [vmem:[#allocation2 + $0x18] sm:$0x1] %vm29, %v93
    %98 = vrot.lane.b32.xlu0 %v92, 112
    %v99 = vpop.permute.xlu0 %98
    %100 = vrot.lane.b32.xlu0 %v93, 112
    %v101 = vpop.permute.xlu0 %100
    %104 = vst.msk [vmem:[#allocation2 + $0x9] sm:$0x1] %vm29, %v99
    %105 = vst.msk [vmem:[#allocation2 + $0x19] sm:$0x1] %vm29, %v101
    %106 = vrot.lane.b32.xlu0 %v92, 96
    %v107 = vpop.permute.xlu0 %106
    %108 = vrot.lane.b32.xlu0 %v93, 96
    %v109 = vpop.permute.xlu0 %108
    %112 = vst.msk [vmem:[#allocation2 + $0xa] sm:$0x1] %vm29, %v107
    %113 = vst.msk [vmem:[#allocation2 + $0x1a] sm:$0x1] %vm29, %v109
    %114 = vrot.lane.b32.xlu0 %v92, 80
    %v115 = vpop.permute.xlu0 %114
    %116 = vrot.lane.b32.xlu0 %v93, 80
    %v117 = vpop.permute.xlu0 %116
    %120 = vst.msk [vmem:[#allocation2 + $0xb] sm:$0x1] %vm29, %v115
    %121 = vst.msk [vmem:[#allocation2 + $0x1b] sm:$0x1] %vm29, %v117
    %122 = vrot.lane.b32.xlu0 %v92, 64
    %v123 = vpop.permute.xlu0 %122
    %124 = vrot.lane.b32.xlu0 %v93, 64
    %v125 = vpop.permute.xlu0 %124
    %128 = vst.msk [vmem:[#allocation2 + $0xc] sm:$0x1] %vm29, %v123
    %129 = vst.msk [vmem:[#allocation2 + $0x1c] sm:$0x1] %vm29, %v125
    %130 = vrot.lane.b32.xlu0 %v92, 48
    %v131 = vpop.permute.xlu0 %130
    %132 = vrot.lane.b32.xlu0 %v93, 48
    %v133 = vpop.permute.xlu0 %132
    %136 = vst.msk [vmem:[#allocation2 + $0xd] sm:$0x1] %vm29, %v131
    %137 = vst.msk [vmem:[#allocation2 + $0x1d] sm:$0x1] %vm29, %v133
    %138 = vrot.lane.b32.xlu0 %v92, 32
    %v139 = vpop.permute.xlu0 %138
    %140 = vrot.lane.b32.xlu0 %v93, 32
    %v141 = vpop.permute.xlu0 %140
    %144 = vst.msk [vmem:[#allocation2 + $0xe] sm:$0x1] %vm29, %v139
    %145 = vst.msk [vmem:[#allocation2 + $0x1e] sm:$0x1] %vm29, %v141
    %146 = vrot.lane.b32.xlu0 %v92, 16
    %v147 = vpop.permute.xlu0 %146
    %148 = vrot.lane.b32.xlu0 %v93, 16
    %v149 = vpop.permute.xlu0 %148
    %152 = vst.msk [vmem:[#allocation2 + $0xf] sm:$0x1] %vm29, %v147
    %153 = vst.msk [vmem:[#allocation2 + $0x1f] sm:$0x1] %vm29, %v149
    %v154 = vadd.f32 %v11, %v27
    %v155 = vadd.f32 %v13, %v28
    %v156 = vfloor.f32 %v154
    %v157 = vfloor.f32 %v155
    %v158 = vsub.f32 %v154, %v156
    %v159 = vsub.f32 %v155, %v157
    %v160 = vcvt.f32.s32.to.zero.pseudo %v156
    %v161 = vcvt.f32.s32.to.zero.pseudo %v157
    %v162 = vadd.s32 %v160, 1
    %v163 = vadd.s32 %v161, 1
    %vm164 = vcmp.ge.s32.totalorder %v160, 0
    %vm165 = vcmp.lt.s32.totalorder %v160, 16
    %vm166 = vmand %vm164, %vm165
    %v167 = vsub.f32 1.0, %v158
    %v168 = vsel %vm166, %v167, 0.0
    %vm169 = vcmp.ge.s32.totalorder %v162, 0
    %vm170 = vcmp.lt.s32.totalorder %v162, 16
    %vm171 = vmand %vm169, %vm170
    %v172 = vsel %vm171, %v158, 0.0
    %vm173 = vcmp.ge.s32.totalorder %v161, 0
    %vm174 = vcmp.lt.s32.totalorder %v161, 16
    %vm175 = vmand %vm173, %vm174
    %v176 = vsub.f32 1.0, %v159
    %v177 = vsel %vm175, %v176, 0.0
    %vm178 = vcmp.ge.s32.totalorder %v163, 0
    %vm179 = vcmp.lt.s32.totalorder %v163, 16
    %vm180 = vmand %vm178, %vm179
    %v181 = vsel %vm180, %v159, 0.0
    %v182 = vperm.slane %v160, 0
    %v183 = vperm.slane %v160, 1
    %vm184 = vcmp.eq.s32.totalorder %v15, %v182
    %vm185 = vcmp.eq.s32.totalorder %v15, %v183
    %vm186 = vcmp.eq.s32.totalorder %v16, %v182
    %vm187 = vcmp.eq.s32.totalorder %v16, %v183
    %v189 = vperm.slane %v168, 0
    %v190 = vperm.slane %v168, 1
    %v193 = vsel %vm184, %v189, 0.0
    %v194 = vsel %vm185, %v190, 0.0
    %v195 = vsel %vm186, %v189, 0.0
    %v196 = vsel %vm187, %v190, 0.0
    %v197 = vperm.slane %v162, 0
    %v198 = vperm.slane %v162, 1
    %vm199 = vcmp.eq.s32.totalorder %v15, %v197
    %vm200 = vcmp.eq.s32.totalorder %v15, %v198
    %vm201 = vcmp.eq.s32.totalorder %v16, %v197
    %vm202 = vcmp.eq.s32.totalorder %v16, %v198
    %v204 = vperm.slane %v172, 0
    %v205 = vperm.slane %v172, 1
    %v208 = vsel %vm199, %v204, 0.0
    %v209 = vsel %vm200, %v205, 0.0
    %v210 = vsel %vm201, %v204, 0.0
    %v211 = vsel %vm202, %v205, 0.0
    %v212 = vadd.f32 %v193, %v208
    %v213 = vadd.f32 %v194, %v209
    %v214 = vadd.f32 %v195, %v210
    %v215 = vadd.f32 %v196, %v211
    %v216 = vperm.slane %v161, 0
    %v217 = vperm.slane %v161, 1
    %vm218 = vcmp.eq.s32.totalorder %v15, %v216
    %vm219 = vcmp.eq.s32.totalorder %v15, %v217
    %vm220 = vcmp.eq.s32.totalorder %v16, %v216
    %vm221 = vcmp.eq.s32.totalorder %v16, %v217
    %v223 = vperm.slane %v177, 0
    %v224 = vperm.slane %v177, 1
    %v227 = vsel %vm218, %v223, 0.0
    %v228 = vsel %vm219, %v224, 0.0
    %v229 = vsel %vm220, %v223, 0.0
    %v230 = vsel %vm221, %v224, 0.0
    %v231 = vperm.slane %v163, 0
    %v232 = vperm.slane %v163, 1
    %vm233 = vcmp.eq.s32.totalorder %v15, %v231
    %vm234 = vcmp.eq.s32.totalorder %v15, %v232
    %vm235 = vcmp.eq.s32.totalorder %v16, %v231
    %vm236 = vcmp.eq.s32.totalorder %v16, %v232
    %v238 = vperm.slane %v181, 0
    %v239 = vperm.slane %v181, 1
    %v242 = vsel %vm233, %v238, 0.0
    %v243 = vsel %vm234, %v239, 0.0
    %v244 = vsel %vm235, %v238, 0.0
    %v245 = vsel %vm236, %v239, 0.0
    %v246 = vadd.f32 %v227, %v242
    %v247 = vadd.f32 %v228, %v243
    %v248 = vadd.f32 %v229, %v244
    %v249 = vadd.f32 %v230, %v245
    %v250 = vld [vmem:[#allocation2] sm:$0xff]
    %v251 = vld [vmem:[#allocation2 + $0x8] sm:$0xff]
    %s252 = scalar_lea.vmem [#allocation2], 16
    %v253 = vld [vmem:[%s252] sm:$0xff]
    %v254 = vld [vmem:[%s252 + $0x8] sm:$0xff]
    %vm255 = vcmask 130048
    %v257 = vsel %vm255, %v250, 0
    %v260 = vsel %vm255, %v251, 0
    %v263 = vsel %vm255, %v253, 0
    %v266 = vsel %vm255, %v254, 0
    %268 = vmatpush.msra.mxu0 0.0
    %269 = vmatpush.msra.mxu0 0.0
    %270 = vmatpush.msra.mxu0 0.0
    %271 = vmatpush.msra.mxu0 0.0
    %272 = vmatpush.msra.mxu0 0.0
    %273 = vmatpush.msra.mxu0 0.0
    %274 = vmatpush.msra.mxu0 0.0
    %275 = vmatpush.msra.mxu0 0.0
    %276 = vmatpush.msra.mxu0 0.0
    %277 = vmatpush.msra.mxu0 0.0
    %278 = vmatpush.msra.mxu0 0.0
    %279 = vmatpush.msra.mxu0 0.0
    %280 = vmatpush.msra.mxu0 0.0
    %281 = vmatpush.msra.mxu0 0.0
    %v282 = vand.u32 %v248, 4294901760
    %283 = vmatpush.msra.mxu0 %v282
    %v284 = vand.u32 %v246, 4294901760
    %285 = vmatpush.msra.mxu0 %v284
    %v286 = vand.u32 %v257, 4294901760
    %v287 = vsub.f32 %v257, %v286
    %v288 = vand.u32 %v287, 4294901760
    %v289 = vsub.f32 %v287, %v288
    %v290 = vand.u32 %v289, 4294901760
    %291 = vmatmul.f32.gmra.mxu0 %v290
    %v292 = vpop.f32.mrf.mxu0
    %v293 = vadd.f32 0.0, %v292
    %v294 = vand.u32 %v260, 4294901760
    %v295 = vsub.f32 %v260, %v294
    %v296 = vand.u32 %v295, 4294901760
    %v297 = vsub.f32 %v295, %v296
    %v298 = vand.u32 %v297, 4294901760
    %299 = vmatmul.f32.gmra.mxu0 %v298
    %v300 = vpop.f32.mrf.mxu0
    %v301 = vadd.f32 0.0, %v300
    %v302 = vand.u32 %v263, 4294901760
    %v303 = vsub.f32 %v263, %v302
    %v304 = vand.u32 %v303, 4294901760
    %v305 = vsub.f32 %v303, %v304
    %v306 = vand.u32 %v305, 4294901760
    %307 = vmatmul.f32.gmra.mxu0 %v306
    %v308 = vpop.f32.mrf.mxu0
    %v309 = vadd.f32 0.0, %v308
    %v310 = vand.u32 %v266, 4294901760
    %v311 = vsub.f32 %v266, %v310
    %v312 = vand.u32 %v311, 4294901760
    %v313 = vsub.f32 %v311, %v312
    %v314 = vand.u32 %v313, 4294901760
    %315 = vmatmul.f32.gmra.mxu0 %v314
    %v316 = vpop.f32.mrf.mxu0
    %v317 = vadd.f32 0.0, %v316
    %318 = vdwg.mxu0
    %319 = vmatpush.msra.mxu0 0.0
    %320 = vmatpush.msra.mxu0 0.0
    %321 = vmatpush.msra.mxu0 0.0
    %322 = vmatpush.msra.mxu0 0.0
    %323 = vmatpush.msra.mxu0 0.0
    %324 = vmatpush.msra.mxu0 0.0
    %325 = vmatpush.msra.mxu0 0.0
    %326 = vmatpush.msra.mxu0 0.0
    %327 = vmatpush.msra.mxu0 0.0
    %328 = vmatpush.msra.mxu0 0.0
    %329 = vmatpush.msra.mxu0 0.0
    %330 = vmatpush.msra.mxu0 0.0
    %331 = vmatpush.msra.mxu0 0.0
    %332 = vmatpush.msra.mxu0 0.0
    %v333 = vand.u32 %v248, 4294901760
    %v334 = vsub.f32 %v248, %v333
    %v335 = vand.u32 %v334, 4294901760
    %v336 = vsub.f32 %v334, %v335
    %v337 = vand.u32 %v336, 4294901760
    %338 = vmatpush.msra.mxu0 %v337
    %v339 = vand.u32 %v246, 4294901760
    %v340 = vsub.f32 %v246, %v339
    %v341 = vand.u32 %v340, 4294901760
    %v342 = vsub.f32 %v340, %v341
    %v343 = vand.u32 %v342, 4294901760
    %344 = vmatpush.msra.mxu0 %v343
    %v345 = vand.u32 %v257, 4294901760
    %346 = vmatmul.f32.gmra.mxu0 %v345
    %v347 = vpop.f32.mrf.mxu0
    %v348 = vadd.f32 %v293, %v347
    %v349 = vand.u32 %v260, 4294901760
    %350 = vmatmul.f32.gmra.mxu0 %v349
    %v351 = vpop.f32.mrf.mxu0
    %v352 = vadd.f32 %v301, %v351
    %v353 = vand.u32 %v263, 4294901760
    %354 = vmatmul.f32.gmra.mxu0 %v353
    %v355 = vpop.f32.mrf.mxu0
    %v356 = vadd.f32 %v309, %v355
    %v357 = vand.u32 %v266, 4294901760
    %358 = vmatmul.f32.gmra.mxu0 %v357
    %v359 = vpop.f32.mrf.mxu0
    %v360 = vadd.f32 %v317, %v359
    %361 = vdwg.mxu0
    %362 = vmatpush.msra.mxu0 0.0
    %363 = vmatpush.msra.mxu0 0.0
    %364 = vmatpush.msra.mxu0 0.0
    %365 = vmatpush.msra.mxu0 0.0
    %366 = vmatpush.msra.mxu0 0.0
    %367 = vmatpush.msra.mxu0 0.0
    %368 = vmatpush.msra.mxu0 0.0
    %369 = vmatpush.msra.mxu0 0.0
    %370 = vmatpush.msra.mxu0 0.0
    %371 = vmatpush.msra.mxu0 0.0
    %372 = vmatpush.msra.mxu0 0.0
    %373 = vmatpush.msra.mxu0 0.0
    %374 = vmatpush.msra.mxu0 0.0
    %375 = vmatpush.msra.mxu0 0.0
    %v376 = vand.u32 %v248, 4294901760
    %v377 = vsub.f32 %v248, %v376
    %378 = vmatpush.msra.mxu0 %v377
    %v379 = vand.u32 %v246, 4294901760
    %v380 = vsub.f32 %v246, %v379
    %381 = vmatpush.msra.mxu0 %v380
    %v382 = vand.u32 %v257, 4294901760
    %v383 = vsub.f32 %v257, %v382
    %384 = vmatmul.f32.gmra.mxu0 %v383
    %v385 = vpop.f32.mrf.mxu0
    %v386 = vadd.f32 %v348, %v385
    %v387 = vand.u32 %v260, 4294901760
    %v388 = vsub.f32 %v260, %v387
    %389 = vmatmul.f32.gmra.mxu0 %v388
    %v390 = vpop.f32.mrf.mxu0
    %v391 = vadd.f32 %v352, %v390
    %v392 = vand.u32 %v263, 4294901760
    %v393 = vsub.f32 %v263, %v392
    %394 = vmatmul.f32.gmra.mxu0 %v393
    %v395 = vpop.f32.mrf.mxu0
    %v396 = vadd.f32 %v356, %v395
    %v397 = vand.u32 %v266, 4294901760
    %v398 = vsub.f32 %v266, %v397
    %399 = vmatmul.f32.gmra.mxu0 %v398
    %v400 = vpop.f32.mrf.mxu0
    %v401 = vadd.f32 %v360, %v400
    %402 = vdwg.mxu0
    %403 = vmatpush.msra.mxu0 0.0
    %404 = vmatpush.msra.mxu0 0.0
    %405 = vmatpush.msra.mxu0 0.0
    %406 = vmatpush.msra.mxu0 0.0
    %407 = vmatpush.msra.mxu0 0.0
    %408 = vmatpush.msra.mxu0 0.0
    %409 = vmatpush.msra.mxu0 0.0
    %410 = vmatpush.msra.mxu0 0.0
    %411 = vmatpush.msra.mxu0 0.0
    %412 = vmatpush.msra.mxu0 0.0
    %413 = vmatpush.msra.mxu0 0.0
    %414 = vmatpush.msra.mxu0 0.0
    %415 = vmatpush.msra.mxu0 0.0
    %416 = vmatpush.msra.mxu0 0.0
    %v417 = vand.u32 %v248, 4294901760
    %418 = vmatpush.msra.mxu0 %v417
    %v419 = vand.u32 %v246, 4294901760
    %420 = vmatpush.msra.mxu0 %v419
    %v421 = vand.u32 %v257, 4294901760
    %v422 = vsub.f32 %v257, %v421
    %v423 = vand.u32 %v422, 4294901760
    %424 = vmatmul.f32.gmra.mxu0 %v423
    %v425 = vpop.f32.mrf.mxu0
    %v426 = vadd.f32 %v386, %v425
    %v427 = vand.u32 %v260, 4294901760
    %v428 = vsub.f32 %v260, %v427
    %v429 = vand.u32 %v428, 4294901760
    %430 = vmatmul.f32.gmra.mxu0 %v429
    %v431 = vpop.f32.mrf.mxu0
    %v432 = vadd.f32 %v391, %v431
    %v433 = vand.u32 %v263, 4294901760
    %v434 = vsub.f32 %v263, %v433
    %v435 = vand.u32 %v434, 4294901760
    %436 = vmatmul.f32.gmra.mxu0 %v435
    %v437 = vpop.f32.mrf.mxu0
    %v438 = vadd.f32 %v396, %v437
    %v439 = vand.u32 %v266, 4294901760
    %v440 = vsub.f32 %v266, %v439
    %v441 = vand.u32 %v440, 4294901760
    %442 = vmatmul.f32.gmra.mxu0 %v441
    %v443 = vpop.f32.mrf.mxu0
    %v444 = vadd.f32 %v401, %v443
    %445 = vdwg.mxu0
    %446 = vmatpush.msra.mxu0 0.0
    %447 = vmatpush.msra.mxu0 0.0
    %448 = vmatpush.msra.mxu0 0.0
    %449 = vmatpush.msra.mxu0 0.0
    %450 = vmatpush.msra.mxu0 0.0
    %451 = vmatpush.msra.mxu0 0.0
    %452 = vmatpush.msra.mxu0 0.0
    %453 = vmatpush.msra.mxu0 0.0
    %454 = vmatpush.msra.mxu0 0.0
    %455 = vmatpush.msra.mxu0 0.0
    %456 = vmatpush.msra.mxu0 0.0
    %457 = vmatpush.msra.mxu0 0.0
    %458 = vmatpush.msra.mxu0 0.0
    %459 = vmatpush.msra.mxu0 0.0
    %v460 = vand.u32 %v248, 4294901760
    %v461 = vsub.f32 %v248, %v460
    %v462 = vand.u32 %v461, 4294901760
    %463 = vmatpush.msra.mxu0 %v462
    %v464 = vand.u32 %v246, 4294901760
    %v465 = vsub.f32 %v246, %v464
    %v466 = vand.u32 %v465, 4294901760
    %467 = vmatpush.msra.mxu0 %v466
    %v468 = vand.u32 %v257, 4294901760
    %469 = vmatmul.f32.gmra.mxu0 %v468
    %v470 = vpop.f32.mrf.mxu0
    %v471 = vadd.f32 %v426, %v470
    %v472 = vand.u32 %v260, 4294901760
    %473 = vmatmul.f32.gmra.mxu0 %v472
    %v474 = vpop.f32.mrf.mxu0
    %v475 = vadd.f32 %v432, %v474
    %v476 = vand.u32 %v263, 4294901760
    %477 = vmatmul.f32.gmra.mxu0 %v476
    %v478 = vpop.f32.mrf.mxu0
    %v479 = vadd.f32 %v438, %v478
    %v480 = vand.u32 %v266, 4294901760
    %481 = vmatmul.f32.gmra.mxu0 %v480
    %v482 = vpop.f32.mrf.mxu0
    %v483 = vadd.f32 %v444, %v482
    %484 = vdwg.mxu0
    %485 = vmatpush.msra.mxu0 0.0
    %486 = vmatpush.msra.mxu0 0.0
    %487 = vmatpush.msra.mxu0 0.0
    %488 = vmatpush.msra.mxu0 0.0
    %489 = vmatpush.msra.mxu0 0.0
    %490 = vmatpush.msra.mxu0 0.0
    %491 = vmatpush.msra.mxu0 0.0
    %492 = vmatpush.msra.mxu0 0.0
    %493 = vmatpush.msra.mxu0 0.0
    %494 = vmatpush.msra.mxu0 0.0
    %495 = vmatpush.msra.mxu0 0.0
    %496 = vmatpush.msra.mxu0 0.0
    %497 = vmatpush.msra.mxu0 0.0
    %498 = vmatpush.msra.mxu0 0.0
    %v499 = vand.u32 %v248, 4294901760
    %500 = vmatpush.msra.mxu0 %v499
    %v501 = vand.u32 %v246, 4294901760
    %502 = vmatpush.msra.mxu0 %v501
    %v503 = vand.u32 %v257, 4294901760
    %504 = vmatmul.f32.gmra.mxu0 %v503
    %v505 = vpop.f32.mrf.mxu0
    %v506 = vadd.f32 %v471, %v505
    %v507 = vand.u32 %v260, 4294901760
    %508 = vmatmul.f32.gmra.mxu0 %v507
    %v509 = vpop.f32.mrf.mxu0
    %v510 = vadd.f32 %v475, %v509
    %v511 = vand.u32 %v263, 4294901760
    %512 = vmatmul.f32.gmra.mxu0 %v511
    %v513 = vpop.f32.mrf.mxu0
    %v514 = vadd.f32 %v479, %v513
    %v515 = vand.u32 %v266, 4294901760
    %516 = vmatmul.f32.gmra.mxu0 %v515
    %v517 = vpop.f32.mrf.mxu0
    %v518 = vadd.f32 %v483, %v517
    %519 = vdwg.mxu0
    %520 = vmatpush.msra.mxu0 0.0
    %521 = vmatpush.msra.mxu0 0.0
    %522 = vmatpush.msra.mxu0 0.0
    %523 = vmatpush.msra.mxu0 0.0
    %524 = vmatpush.msra.mxu0 0.0
    %525 = vmatpush.msra.mxu0 0.0
    %526 = vmatpush.msra.mxu0 0.0
    %527 = vmatpush.msra.mxu0 0.0
    %528 = vmatpush.msra.mxu0 0.0
    %529 = vmatpush.msra.mxu0 0.0
    %530 = vmatpush.msra.mxu0 0.0
    %531 = vmatpush.msra.mxu0 0.0
    %532 = vmatpush.msra.mxu0 0.0
    %533 = vmatpush.msra.mxu0 0.0
    %v534 = vand.u32 %v249, 4294901760
    %535 = vmatpush.msra.mxu0 %v534
    %v536 = vand.u32 %v247, 4294901760
    %537 = vmatpush.msra.mxu0 %v536
    %v538 = vand.u32 %v257, 4294901760
    %v539 = vsub.f32 %v257, %v538
    %v540 = vand.u32 %v539, 4294901760
    %v541 = vsub.f32 %v539, %v540
    %v542 = vand.u32 %v541, 4294901760
    %543 = vmatmul.f32.gmra.mxu0 %v542
    %v544 = vpop.f32.mrf.mxu0
    %v545 = vadd.f32 0.0, %v544
    %v546 = vand.u32 %v260, 4294901760
    %v547 = vsub.f32 %v260, %v546
    %v548 = vand.u32 %v547, 4294901760
    %v549 = vsub.f32 %v547, %v548
    %v550 = vand.u32 %v549, 4294901760
    %551 = vmatmul.f32.gmra.mxu0 %v550
    %v552 = vpop.f32.mrf.mxu0
    %v553 = vadd.f32 0.0, %v552
    %v554 = vand.u32 %v263, 4294901760
    %v555 = vsub.f32 %v263, %v554
    %v556 = vand.u32 %v555, 4294901760
    %v557 = vsub.f32 %v555, %v556
    %v558 = vand.u32 %v557, 4294901760
    %559 = vmatmul.f32.gmra.mxu0 %v558
    %v560 = vpop.f32.mrf.mxu0
    %v561 = vadd.f32 0.0, %v560
    %v562 = vand.u32 %v266, 4294901760
    %v563 = vsub.f32 %v266, %v562
    %v564 = vand.u32 %v563, 4294901760
    %v565 = vsub.f32 %v563, %v564
    %v566 = vand.u32 %v565, 4294901760
    %567 = vmatmul.f32.gmra.mxu0 %v566
    %v568 = vpop.f32.mrf.mxu0
    %v569 = vadd.f32 0.0, %v568
    %570 = vdwg.mxu0
    %571 = vmatpush.msra.mxu0 0.0
    %572 = vmatpush.msra.mxu0 0.0
    %573 = vmatpush.msra.mxu0 0.0
    %574 = vmatpush.msra.mxu0 0.0
    %575 = vmatpush.msra.mxu0 0.0
    %576 = vmatpush.msra.mxu0 0.0
    %577 = vmatpush.msra.mxu0 0.0
    %578 = vmatpush.msra.mxu0 0.0
    %579 = vmatpush.msra.mxu0 0.0
    %580 = vmatpush.msra.mxu0 0.0
    %581 = vmatpush.msra.mxu0 0.0
    %582 = vmatpush.msra.mxu0 0.0
    %583 = vmatpush.msra.mxu0 0.0
    %584 = vmatpush.msra.mxu0 0.0
    %v585 = vand.u32 %v249, 4294901760
    %v586 = vsub.f32 %v249, %v585
    %v587 = vand.u32 %v586, 4294901760
    %v588 = vsub.f32 %v586, %v587
    %v589 = vand.u32 %v588, 4294901760
    %590 = vmatpush.msra.mxu0 %v589
    %v591 = vand.u32 %v247, 4294901760
    %v592 = vsub.f32 %v247, %v591
    %v593 = vand.u32 %v592, 4294901760
    %v594 = vsub.f32 %v592, %v593
    %v595 = vand.u32 %v594, 4294901760
    %596 = vmatpush.msra.mxu0 %v595
    %v597 = vand.u32 %v257, 4294901760
    %598 = vmatmul.f32.gmra.mxu0 %v597
    %v599 = vpop.f32.mrf.mxu0
    %v600 = vadd.f32 %v545, %v599
    %v601 = vand.u32 %v260, 4294901760
    %602 = vmatmul.f32.gmra.mxu0 %v601
    %v603 = vpop.f32.mrf.mxu0
    %v604 = vadd.f32 %v553, %v603
    %v605 = vand.u32 %v263, 4294901760
    %606 = vmatmul.f32.gmra.mxu0 %v605
    %v607 = vpop.f32.mrf.mxu0
    %v608 = vadd.f32 %v561, %v607
    %v609 = vand.u32 %v266, 4294901760
    %610 = vmatmul.f32.gmra.mxu0 %v609
    %v611 = vpop.f32.mrf.mxu0
    %v612 = vadd.f32 %v569, %v611
    %613 = vdwg.mxu0
    %614 = vmatpush.msra.mxu0 0.0
    %615 = vmatpush.msra.mxu0 0.0
    %616 = vmatpush.msra.mxu0 0.0
    %617 = vmatpush.msra.mxu0 0.0
    %618 = vmatpush.msra.mxu0 0.0
    %619 = vmatpush.msra.mxu0 0.0
    %620 = vmatpush.msra.mxu0 0.0
    %621 = vmatpush.msra.mxu0 0.0
    %622 = vmatpush.msra.mxu0 0.0
    %623 = vmatpush.msra.mxu0 0.0
    %624 = vmatpush.msra.mxu0 0.0
    %625 = vmatpush.msra.mxu0 0.0
    %626 = vmatpush.msra.mxu0 0.0
    %627 = vmatpush.msra.mxu0 0.0
    %v628 = vand.u32 %v249, 4294901760
    %v629 = vsub.f32 %v249, %v628
    %630 = vmatpush.msra.mxu0 %v629
    %v631 = vand.u32 %v247, 4294901760
    %v632 = vsub.f32 %v247, %v631
    %633 = vmatpush.msra.mxu0 %v632
    %v634 = vand.u32 %v257, 4294901760
    %v635 = vsub.f32 %v257, %v634
    %636 = vmatmul.f32.gmra.mxu0 %v635
    %v637 = vpop.f32.mrf.mxu0
    %v638 = vadd.f32 %v600, %v637
    %v639 = vand.u32 %v260, 4294901760
    %v640 = vsub.f32 %v260, %v639
    %641 = vmatmul.f32.gmra.mxu0 %v640
    %v642 = vpop.f32.mrf.mxu0
    %v643 = vadd.f32 %v604, %v642
    %v644 = vand.u32 %v263, 4294901760
    %v645 = vsub.f32 %v263, %v644
    %646 = vmatmul.f32.gmra.mxu0 %v645
    %v647 = vpop.f32.mrf.mxu0
    %v648 = vadd.f32 %v608, %v647
    %v649 = vand.u32 %v266, 4294901760
    %v650 = vsub.f32 %v266, %v649
    %651 = vmatmul.f32.gmra.mxu0 %v650
    %v652 = vpop.f32.mrf.mxu0
    %v653 = vadd.f32 %v612, %v652
    %654 = vdwg.mxu0
    %655 = vmatpush.msra.mxu0 0.0
    %656 = vmatpush.msra.mxu0 0.0
    %657 = vmatpush.msra.mxu0 0.0
    %658 = vmatpush.msra.mxu0 0.0
    %659 = vmatpush.msra.mxu0 0.0
    %660 = vmatpush.msra.mxu0 0.0
    %661 = vmatpush.msra.mxu0 0.0
    %662 = vmatpush.msra.mxu0 0.0
    %663 = vmatpush.msra.mxu0 0.0
    %664 = vmatpush.msra.mxu0 0.0
    %665 = vmatpush.msra.mxu0 0.0
    %666 = vmatpush.msra.mxu0 0.0
    %667 = vmatpush.msra.mxu0 0.0
    %668 = vmatpush.msra.mxu0 0.0
    %v669 = vand.u32 %v249, 4294901760
    %670 = vmatpush.msra.mxu0 %v669
    %v671 = vand.u32 %v247, 4294901760
    %672 = vmatpush.msra.mxu0 %v671
    %v673 = vand.u32 %v257, 4294901760
    %v674 = vsub.f32 %v257, %v673
    %v675 = vand.u32 %v674, 4294901760
    %676 = vmatmul.f32.gmra.mxu0 %v675
    %v677 = vpop.f32.mrf.mxu0
    %v678 = vadd.f32 %v638, %v677
    %v679 = vand.u32 %v260, 4294901760
    %v680 = vsub.f32 %v260, %v679
    %v681 = vand.u32 %v680, 4294901760
    %682 = vmatmul.f32.gmra.mxu0 %v681
    %v683 = vpop.f32.mrf.mxu0
    %v684 = vadd.f32 %v643, %v683
    %v685 = vand.u32 %v263, 4294901760
    %v686 = vsub.f32 %v263, %v685
    %v687 = vand.u32 %v686, 4294901760
    %688 = vmatmul.f32.gmra.mxu0 %v687
    %v689 = vpop.f32.mrf.mxu0
    %v690 = vadd.f32 %v648, %v689
    %v691 = vand.u32 %v266, 4294901760
    %v692 = vsub.f32 %v266, %v691
    %v693 = vand.u32 %v692, 4294901760
    %694 = vmatmul.f32.gmra.mxu0 %v693
    %v695 = vpop.f32.mrf.mxu0
    %v696 = vadd.f32 %v653, %v695
    %697 = vdwg.mxu0
    %698 = vmatpush.msra.mxu0 0.0
    %699 = vmatpush.msra.mxu0 0.0
    %700 = vmatpush.msra.mxu0 0.0
    %701 = vmatpush.msra.mxu0 0.0
    %702 = vmatpush.msra.mxu0 0.0
    %703 = vmatpush.msra.mxu0 0.0
    %704 = vmatpush.msra.mxu0 0.0
    %705 = vmatpush.msra.mxu0 0.0
    %706 = vmatpush.msra.mxu0 0.0
    %707 = vmatpush.msra.mxu0 0.0
    %708 = vmatpush.msra.mxu0 0.0
    %709 = vmatpush.msra.mxu0 0.0
    %710 = vmatpush.msra.mxu0 0.0
    %711 = vmatpush.msra.mxu0 0.0
    %v712 = vand.u32 %v249, 4294901760
    %v713 = vsub.f32 %v249, %v712
    %v714 = vand.u32 %v713, 4294901760
    %715 = vmatpush.msra.mxu0 %v714
    %v716 = vand.u32 %v247, 4294901760
    %v717 = vsub.f32 %v247, %v716
    %v718 = vand.u32 %v717, 4294901760
    %719 = vmatpush.msra.mxu0 %v718
    %v720 = vand.u32 %v257, 4294901760
    %721 = vmatmul.f32.gmra.mxu0 %v720
    %v722 = vpop.f32.mrf.mxu0
    %v723 = vadd.f32 %v678, %v722
    %v724 = vand.u32 %v260, 4294901760
    %725 = vmatmul.f32.gmra.mxu0 %v724
    %v726 = vpop.f32.mrf.mxu0
    %v727 = vadd.f32 %v684, %v726
    %v728 = vand.u32 %v263, 4294901760
    %729 = vmatmul.f32.gmra.mxu0 %v728
    %v730 = vpop.f32.mrf.mxu0
    %v731 = vadd.f32 %v690, %v730
    %v732 = vand.u32 %v266, 4294901760
    %733 = vmatmul.f32.gmra.mxu0 %v732
    %v734 = vpop.f32.mrf.mxu0
    %v735 = vadd.f32 %v696, %v734
    %736 = vdwg.mxu0
    %737 = vmatpush.msra.mxu0 0.0
    %738 = vmatpush.msra.mxu0 0.0
    %739 = vmatpush.msra.mxu0 0.0
    %740 = vmatpush.msra.mxu0 0.0
    %741 = vmatpush.msra.mxu0 0.0
    %742 = vmatpush.msra.mxu0 0.0
    %743 = vmatpush.msra.mxu0 0.0
    %744 = vmatpush.msra.mxu0 0.0
    %745 = vmatpush.msra.mxu0 0.0
    %746 = vmatpush.msra.mxu0 0.0
    %747 = vmatpush.msra.mxu0 0.0
    %748 = vmatpush.msra.mxu0 0.0
    %749 = vmatpush.msra.mxu0 0.0
    %750 = vmatpush.msra.mxu0 0.0
    %v751 = vand.u32 %v249, 4294901760
    %752 = vmatpush.msra.mxu0 %v751
    %v753 = vand.u32 %v247, 4294901760
    %754 = vmatpush.msra.mxu0 %v753
    %v755 = vand.u32 %v257, 4294901760
    %756 = vmatmul.f32.gmra.mxu0 %v755
    %v757 = vpop.f32.mrf.mxu0
    %v758 = vadd.f32 %v723, %v757
    %v759 = vand.u32 %v260, 4294901760
    %760 = vmatmul.f32.gmra.mxu0 %v759
    %v761 = vpop.f32.mrf.mxu0
    %v762 = vadd.f32 %v727, %v761
    %v763 = vand.u32 %v263, 4294901760
    %764 = vmatmul.f32.gmra.mxu0 %v763
    %v765 = vpop.f32.mrf.mxu0
    %v766 = vadd.f32 %v731, %v765
    %v767 = vand.u32 %v266, 4294901760
    %768 = vmatmul.f32.gmra.mxu0 %v767
    %v769 = vpop.f32.mrf.mxu0
    %v770 = vadd.f32 %v735, %v769
    %771 = vdwg.mxu0
    %v772 = vmul.f32 %v212, %v506
    %v773 = vmul.f32 %v213, %v758
    %v774 = vmul.f32 %v214, %v510
    %v775 = vmul.f32 %v215, %v762
    %v776 = vadd.f32 %v772, %v774
    %v777 = vrot.slane %v776, 4
    %v778 = vadd.f32 %v776, %v777
    %v779 = vrot.slane %v778, 2
    %v780 = vadd.f32 %v778, %v779
    %v781 = vrot.slane %v780, 1
    %v782 = vadd.f32 %v780, %v781
    %v783 = vadd.f32 %v773, %v775
    %v784 = vrot.slane %v783, 4
    %v785 = vadd.f32 %v783, %v784
    %v786 = vrot.slane %v785, 2
    %v787 = vadd.f32 %v785, %v786
    %v788 = vrot.slane %v787, 1
    %v789 = vadd.f32 %v787, %v788
    %v790 = vmul.f32 %v212, %v514
    %v791 = vmul.f32 %v213, %v766
    %v792 = vmul.f32 %v214, %v518
    %v793 = vmul.f32 %v215, %v770
    %v794 = vadd.f32 %v790, %v792
    %v795 = vrot.slane %v794, 4
    %v796 = vadd.f32 %v794, %v795
    %v797 = vrot.slane %v796, 2
    %v798 = vadd.f32 %v796, %v797
    %v799 = vrot.slane %v798, 1
    %v800 = vadd.f32 %v798, %v799
    %v801 = vadd.f32 %v791, %v793
    %v802 = vrot.slane %v801, 4
    %v803 = vadd.f32 %v801, %v802
    %v804 = vrot.slane %v803, 2
    %v805 = vadd.f32 %v803, %v804
    %v806 = vrot.slane %v805, 1
    %v807 = vadd.f32 %v805, %v806
    %v812 = vrot.slane %v789, 7
    %v813 = vrot.slane %v807, 7
    %vm814 = vcmask 1040384
    %v815 = vsel %vm814, %v782, %v812
    %v816 = vsel %vm814, %v800, %v813
    %v819 = vadd.f32 %v27, %v815
    %v820 = vadd.f32 %v28, %v816
  $region14: #{vecint_pallas.1} parent=0 // loop_footer
    %s26 = sadd.s32 1, %s22
  $region15: #{vecint_pallas.1} parent=0 // loop_footer_branch
    %21 = sbr.rel target = $region11
  $region16: #{vecint_pallas.1} parent=0 // loop_exit
    _
  %v821 = vlaneseq
  %vm822 = vcmp.ge.s32.totalorder %v821, 0
  %vm823 = vcmp.lt.s32.totalorder %v821, 256
  %vm824 = vmand %vm822, %vm823
  %825 = vst.msk [vmem:[%s2] sm:$0x3] %vm824, %v27
  %826 = vst.msk [vmem:[%s2 + $0x2] sm:$0x3] %vm824, %v28
  %s827 = scalar_lea.vmem %s0, 4
  %v828 = vld [vmem:[%s827] sm:$0x3]
  %v829 = vld [vmem:[%s827 + $0x2] sm:$0x3]
  %v830 = vmul.f32 %v828, 0.0625
  %v831 = vmul.f32 %v829, 0.0625
  loop: start=0, step=1, limit=4
  $region17: #{vecint_pallas.1} parent=0 // loop_pre_header
    _
  $region18: #{vecint_pallas.1} parent=0 // loop_header
    %s833 = sphi 0, %s837
    %p834 = scmp.ge.s32.totalorder %s833, 4
    %v838 = vphi %v830, %v1630
    %v839 = vphi %v831, %v1631
  $region19: #{vecint_pallas.1} parent=0 // loop_header_branch
    %836 = sbr.rel (%p834) target = $region23
  $region20: #{vecint_pallas.1} parent=0 // loop_body
    %vm840 = vcmask 122880
    %841 = vst.msk [vmem:[#allocation2] sm:$0x1] %vm840, %v838
    %842 = vst.msk [vmem:[#allocation2 + $0x10] sm:$0x1] %vm840, %v839
    %v845 = vperm.slane %v838, 0
    %v846 = vperm.slane %v839, 0
    %847 = vrot.lane.b32.xlu0 %v845, 112
    %v848 = vpop.permute.xlu0 %847
    %849 = vrot.lane.b32.xlu0 %v846, 112
    %v850 = vpop.permute.xlu0 %849
    %853 = vst.msk [vmem:[#allocation2 + $0x1] sm:$0x1] %vm840, %v848
    %854 = vst.msk [vmem:[#allocation2 + $0x11] sm:$0x1] %vm840, %v850
    %855 = vrot.lane.b32.xlu0 %v845, 96
    %v856 = vpop.permute.xlu0 %855
    %857 = vrot.lane.b32.xlu0 %v846, 96
    %v858 = vpop.permute.xlu0 %857
    %861 = vst.msk [vmem:[#allocation2 + $0x2] sm:$0x1] %vm840, %v856
    %862 = vst.msk [vmem:[#allocation2 + $0x12] sm:$0x1] %vm840, %v858
    %863 = vrot.lane.b32.xlu0 %v845, 80
    %v864 = vpop.permute.xlu0 %863
    %865 = vrot.lane.b32.xlu0 %v846, 80
    %v866 = vpop.permute.xlu0 %865
    %869 = vst.msk [vmem:[#allocation2 + $0x3] sm:$0x1] %vm840, %v864
    %870 = vst.msk [vmem:[#allocation2 + $0x13] sm:$0x1] %vm840, %v866
    %871 = vrot.lane.b32.xlu0 %v845, 64
    %v872 = vpop.permute.xlu0 %871
    %873 = vrot.lane.b32.xlu0 %v846, 64
    %v874 = vpop.permute.xlu0 %873
    %877 = vst.msk [vmem:[#allocation2 + $0x4] sm:$0x1] %vm840, %v872
    %878 = vst.msk [vmem:[#allocation2 + $0x14] sm:$0x1] %vm840, %v874
    %879 = vrot.lane.b32.xlu0 %v845, 48
    %v880 = vpop.permute.xlu0 %879
    %881 = vrot.lane.b32.xlu0 %v846, 48
    %v882 = vpop.permute.xlu0 %881
    %885 = vst.msk [vmem:[#allocation2 + $0x5] sm:$0x1] %vm840, %v880
    %886 = vst.msk [vmem:[#allocation2 + $0x15] sm:$0x1] %vm840, %v882
    %887 = vrot.lane.b32.xlu0 %v845, 32
    %v888 = vpop.permute.xlu0 %887
    %889 = vrot.lane.b32.xlu0 %v846, 32
    %v890 = vpop.permute.xlu0 %889
    %893 = vst.msk [vmem:[#allocation2 + $0x6] sm:$0x1] %vm840, %v888
    %894 = vst.msk [vmem:[#allocation2 + $0x16] sm:$0x1] %vm840, %v890
    %895 = vrot.lane.b32.xlu0 %v845, 16
    %v896 = vpop.permute.xlu0 %895
    %897 = vrot.lane.b32.xlu0 %v846, 16
    %v898 = vpop.permute.xlu0 %897
    %901 = vst.msk [vmem:[#allocation2 + $0x7] sm:$0x1] %vm840, %v896
    %902 = vst.msk [vmem:[#allocation2 + $0x17] sm:$0x1] %vm840, %v898
    %v903 = vperm.slane %v838, 1
    %v904 = vperm.slane %v839, 1
    %907 = vst.msk [vmem:[#allocation2 + $0x8] sm:$0x1] %vm840, %v903
    %908 = vst.msk [vmem:[#allocation2 + $0x18] sm:$0x1] %vm840, %v904
    %909 = vrot.lane.b32.xlu0 %v903, 112
    %v910 = vpop.permute.xlu0 %909
    %911 = vrot.lane.b32.xlu0 %v904, 112
    %v912 = vpop.permute.xlu0 %911
    %915 = vst.msk [vmem:[#allocation2 + $0x9] sm:$0x1] %vm840, %v910
    %916 = vst.msk [vmem:[#allocation2 + $0x19] sm:$0x1] %vm840, %v912
    %917 = vrot.lane.b32.xlu0 %v903, 96
    %v918 = vpop.permute.xlu0 %917
    %919 = vrot.lane.b32.xlu0 %v904, 96
    %v920 = vpop.permute.xlu0 %919
    %923 = vst.msk [vmem:[#allocation2 + $0xa] sm:$0x1] %vm840, %v918
    %924 = vst.msk [vmem:[#allocation2 + $0x1a] sm:$0x1] %vm840, %v920
    %925 = vrot.lane.b32.xlu0 %v903, 80
    %v926 = vpop.permute.xlu0 %925
    %927 = vrot.lane.b32.xlu0 %v904, 80
    %v928 = vpop.permute.xlu0 %927
    %931 = vst.msk [vmem:[#allocation2 + $0xb] sm:$0x1] %vm840, %v926
    %932 = vst.msk [vmem:[#allocation2 + $0x1b] sm:$0x1] %vm840, %v928
    %933 = vrot.lane.b32.xlu0 %v903, 64
    %v934 = vpop.permute.xlu0 %933
    %935 = vrot.lane.b32.xlu0 %v904, 64
    %v936 = vpop.permute.xlu0 %935
    %939 = vst.msk [vmem:[#allocation2 + $0xc] sm:$0x1] %vm840, %v934
    %940 = vst.msk [vmem:[#allocation2 + $0x1c] sm:$0x1] %vm840, %v936
    %941 = vrot.lane.b32.xlu0 %v903, 48
    %v942 = vpop.permute.xlu0 %941
    %943 = vrot.lane.b32.xlu0 %v904, 48
    %v944 = vpop.permute.xlu0 %943
    %947 = vst.msk [vmem:[#allocation2 + $0xd] sm:$0x1] %vm840, %v942
    %948 = vst.msk [vmem:[#allocation2 + $0x1d] sm:$0x1] %vm840, %v944
    %949 = vrot.lane.b32.xlu0 %v903, 32
    %v950 = vpop.permute.xlu0 %949
    %951 = vrot.lane.b32.xlu0 %v904, 32
    %v952 = vpop.permute.xlu0 %951
    %955 = vst.msk [vmem:[#allocation2 + $0xe] sm:$0x1] %vm840, %v950
    %956 = vst.msk [vmem:[#allocation2 + $0x1e] sm:$0x1] %vm840, %v952
    %957 = vrot.lane.b32.xlu0 %v903, 16
    %v958 = vpop.permute.xlu0 %957
    %959 = vrot.lane.b32.xlu0 %v904, 16
    %v960 = vpop.permute.xlu0 %959
    %963 = vst.msk [vmem:[#allocation2 + $0xf] sm:$0x1] %vm840, %v958
    %964 = vst.msk [vmem:[#allocation2 + $0x1f] sm:$0x1] %vm840, %v960
    %v965 = vadd.f32 %v11, %v838
    %v966 = vadd.f32 %v13, %v839
    %v967 = vfloor.f32 %v965
    %v968 = vfloor.f32 %v966
    %v969 = vsub.f32 %v965, %v967
    %v970 = vsub.f32 %v966, %v968
    %v971 = vcvt.f32.s32.to.zero.pseudo %v967
    %v972 = vcvt.f32.s32.to.zero.pseudo %v968
    %v973 = vadd.s32 %v971, 1
    %v974 = vadd.s32 %v972, 1
    %vm975 = vcmp.ge.s32.totalorder %v971, 0
    %vm976 = vcmp.lt.s32.totalorder %v971, 16
    %vm977 = vmand %vm975, %vm976
    %v978 = vsub.f32 1.0, %v969
    %v979 = vsel %vm977, %v978, 0.0
    %vm980 = vcmp.ge.s32.totalorder %v973, 0
    %vm981 = vcmp.lt.s32.totalorder %v973, 16
    %vm982 = vmand %vm980, %vm981
    %v983 = vsel %vm982, %v969, 0.0
    %vm984 = vcmp.ge.s32.totalorder %v972, 0
    %vm985 = vcmp.lt.s32.totalorder %v972, 16
    %vm986 = vmand %vm984, %vm985
    %v987 = vsub.f32 1.0, %v970
    %v988 = vsel %vm986, %v987, 0.0
    %vm989 = vcmp.ge.s32.totalorder %v974, 0
    %vm990 = vcmp.lt.s32.totalorder %v974, 16
    %vm991 = vmand %vm989, %vm990
    %v992 = vsel %vm991, %v970, 0.0
    %v993 = vperm.slane %v971, 0
    %v994 = vperm.slane %v971, 1
    %vm995 = vcmp.eq.s32.totalorder %v15, %v993
    %vm996 = vcmp.eq.s32.totalorder %v15, %v994
    %vm997 = vcmp.eq.s32.totalorder %v16, %v993
    %vm998 = vcmp.eq.s32.totalorder %v16, %v994
    %v1000 = vperm.slane %v979, 0
    %v1001 = vperm.slane %v979, 1
    %v1004 = vsel %vm995, %v1000, 0.0
    %v1005 = vsel %vm996, %v1001, 0.0
    %v1006 = vsel %vm997, %v1000, 0.0
    %v1007 = vsel %vm998, %v1001, 0.0
    %v1008 = vperm.slane %v973, 0
    %v1009 = vperm.slane %v973, 1
    %vm1010 = vcmp.eq.s32.totalorder %v15, %v1008
    %vm1011 = vcmp.eq.s32.totalorder %v15, %v1009
    %vm1012 = vcmp.eq.s32.totalorder %v16, %v1008
    %vm1013 = vcmp.eq.s32.totalorder %v16, %v1009
    %v1015 = vperm.slane %v983, 0
    %v1016 = vperm.slane %v983, 1
    %v1019 = vsel %vm1010, %v1015, 0.0
    %v1020 = vsel %vm1011, %v1016, 0.0
    %v1021 = vsel %vm1012, %v1015, 0.0
    %v1022 = vsel %vm1013, %v1016, 0.0
    %v1023 = vadd.f32 %v1004, %v1019
    %v1024 = vadd.f32 %v1005, %v1020
    %v1025 = vadd.f32 %v1006, %v1021
    %v1026 = vadd.f32 %v1007, %v1022
    %v1027 = vperm.slane %v972, 0
    %v1028 = vperm.slane %v972, 1
    %vm1029 = vcmp.eq.s32.totalorder %v15, %v1027
    %vm1030 = vcmp.eq.s32.totalorder %v15, %v1028
    %vm1031 = vcmp.eq.s32.totalorder %v16, %v1027
    %vm1032 = vcmp.eq.s32.totalorder %v16, %v1028
    %v1034 = vperm.slane %v988, 0
    %v1035 = vperm.slane %v988, 1
    %v1038 = vsel %vm1029, %v1034, 0.0
    %v1039 = vsel %vm1030, %v1035, 0.0
    %v1040 = vsel %vm1031, %v1034, 0.0
    %v1041 = vsel %vm1032, %v1035, 0.0
    %v1042 = vperm.slane %v974, 0
    %v1043 = vperm.slane %v974, 1
    %vm1044 = vcmp.eq.s32.totalorder %v15, %v1042
    %vm1045 = vcmp.eq.s32.totalorder %v15, %v1043
    %vm1046 = vcmp.eq.s32.totalorder %v16, %v1042
    %vm1047 = vcmp.eq.s32.totalorder %v16, %v1043
    %v1049 = vperm.slane %v992, 0
    %v1050 = vperm.slane %v992, 1
    %v1053 = vsel %vm1044, %v1049, 0.0
    %v1054 = vsel %vm1045, %v1050, 0.0
    %v1055 = vsel %vm1046, %v1049, 0.0
    %v1056 = vsel %vm1047, %v1050, 0.0
    %v1057 = vadd.f32 %v1038, %v1053
    %v1058 = vadd.f32 %v1039, %v1054
    %v1059 = vadd.f32 %v1040, %v1055
    %v1060 = vadd.f32 %v1041, %v1056
    %v1061 = vld [vmem:[#allocation2] sm:$0xff]
    %v1062 = vld [vmem:[#allocation2 + $0x8] sm:$0xff]
    %s1063 = scalar_lea.vmem [#allocation2], 16
    %v1064 = vld [vmem:[%s1063] sm:$0xff]
    %v1065 = vld [vmem:[%s1063 + $0x8] sm:$0xff]
    %vm1066 = vcmask 130048
    %v1068 = vsel %vm1066, %v1061, 0
    %v1071 = vsel %vm1066, %v1062, 0
    %v1074 = vsel %vm1066, %v1064, 0
    %v1077 = vsel %vm1066, %v1065, 0
    %1079 = vmatpush.msra.mxu0 0.0
    %1080 = vmatpush.msra.mxu0 0.0
    %1081 = vmatpush.msra.mxu0 0.0
    %1082 = vmatpush.msra.mxu0 0.0
    %1083 = vmatpush.msra.mxu0 0.0
    %1084 = vmatpush.msra.mxu0 0.0
    %1085 = vmatpush.msra.mxu0 0.0
    %1086 = vmatpush.msra.mxu0 0.0
    %1087 = vmatpush.msra.mxu0 0.0
    %1088 = vmatpush.msra.mxu0 0.0
    %1089 = vmatpush.msra.mxu0 0.0
    %1090 = vmatpush.msra.mxu0 0.0
    %1091 = vmatpush.msra.mxu0 0.0
    %1092 = vmatpush.msra.mxu0 0.0
    %v1093 = vand.u32 %v1059, 4294901760
    %1094 = vmatpush.msra.mxu0 %v1093
    %v1095 = vand.u32 %v1057, 4294901760
    %1096 = vmatpush.msra.mxu0 %v1095
    %v1097 = vand.u32 %v1068, 4294901760
    %v1098 = vsub.f32 %v1068, %v1097
    %v1099 = vand.u32 %v1098, 4294901760
    %v1100 = vsub.f32 %v1098, %v1099
    %v1101 = vand.u32 %v1100, 4294901760
    %1102 = vmatmul.f32.gmra.mxu0 %v1101
    %v1103 = vpop.f32.mrf.mxu0
    %v1104 = vadd.f32 0.0, %v1103
    %v1105 = vand.u32 %v1071, 4294901760
    %v1106 = vsub.f32 %v1071, %v1105
    %v1107 = vand.u32 %v1106, 4294901760
    %v1108 = vsub.f32 %v1106, %v1107
    %v1109 = vand.u32 %v1108, 4294901760
    %1110 = vmatmul.f32.gmra.mxu0 %v1109
    %v1111 = vpop.f32.mrf.mxu0
    %v1112 = vadd.f32 0.0, %v1111
    %v1113 = vand.u32 %v1074, 4294901760
    %v1114 = vsub.f32 %v1074, %v1113
    %v1115 = vand.u32 %v1114, 4294901760
    %v1116 = vsub.f32 %v1114, %v1115
    %v1117 = vand.u32 %v1116, 4294901760
    %1118 = vmatmul.f32.gmra.mxu0 %v1117
    %v1119 = vpop.f32.mrf.mxu0
    %v1120 = vadd.f32 0.0, %v1119
    %v1121 = vand.u32 %v1077, 4294901760
    %v1122 = vsub.f32 %v1077, %v1121
    %v1123 = vand.u32 %v1122, 4294901760
    %v1124 = vsub.f32 %v1122, %v1123
    %v1125 = vand.u32 %v1124, 4294901760
    %1126 = vmatmul.f32.gmra.mxu0 %v1125
    %v1127 = vpop.f32.mrf.mxu0
    %v1128 = vadd.f32 0.0, %v1127
    %1129 = vdwg.mxu0
    %1130 = vmatpush.msra.mxu0 0.0
    %1131 = vmatpush.msra.mxu0 0.0
    %1132 = vmatpush.msra.mxu0 0.0
    %1133 = vmatpush.msra.mxu0 0.0
    %1134 = vmatpush.msra.mxu0 0.0
    %1135 = vmatpush.msra.mxu0 0.0
    %1136 = vmatpush.msra.mxu0 0.0
    %1137 = vmatpush.msra.mxu0 0.0
    %1138 = vmatpush.msra.mxu0 0.0
    %1139 = vmatpush.msra.mxu0 0.0
    %1140 = vmatpush.msra.mxu0 0.0
    %1141 = vmatpush.msra.mxu0 0.0
    %1142 = vmatpush.msra.mxu0 0.0
    %1143 = vmatpush.msra.mxu0 0.0
    %v1144 = vand.u32 %v1059, 4294901760
    %v1145 = vsub.f32 %v1059, %v1144
    %v1146 = vand.u32 %v1145, 4294901760
    %v1147 = vsub.f32 %v1145, %v1146
    %v1148 = vand.u32 %v1147, 4294901760
    %1149 = vmatpush.msra.mxu0 %v1148
    %v1150 = vand.u32 %v1057, 4294901760
    %v1151 = vsub.f32 %v1057, %v1150
    %v1152 = vand.u32 %v1151, 4294901760
    %v1153 = vsub.f32 %v1151, %v1152
    %v1154 = vand.u32 %v1153, 4294901760
    %1155 = vmatpush.msra.mxu0 %v1154
    %v1156 = vand.u32 %v1068, 4294901760
    %1157 = vmatmul.f32.gmra.mxu0 %v1156
    %v1158 = vpop.f32.mrf.mxu0
    %v1159 = vadd.f32 %v1104, %v1158
    %v1160 = vand.u32 %v1071, 4294901760
    %1161 = vmatmul.f32.gmra.mxu0 %v1160
    %v1162 = vpop.f32.mrf.mxu0
    %v1163 = vadd.f32 %v1112, %v1162
    %v1164 = vand.u32 %v1074, 4294901760
    %1165 = vmatmul.f32.gmra.mxu0 %v1164
    %v1166 = vpop.f32.mrf.mxu0
    %v1167 = vadd.f32 %v1120, %v1166
    %v1168 = vand.u32 %v1077, 4294901760
    %1169 = vmatmul.f32.gmra.mxu0 %v1168
    %v1170 = vpop.f32.mrf.mxu0
    %v1171 = vadd.f32 %v1128, %v1170
    %1172 = vdwg.mxu0
    %1173 = vmatpush.msra.mxu0 0.0
    %1174 = vmatpush.msra.mxu0 0.0
    %1175 = vmatpush.msra.mxu0 0.0
    %1176 = vmatpush.msra.mxu0 0.0
    %1177 = vmatpush.msra.mxu0 0.0
    %1178 = vmatpush.msra.mxu0 0.0
    %1179 = vmatpush.msra.mxu0 0.0
    %1180 = vmatpush.msra.mxu0 0.0
    %1181 = vmatpush.msra.mxu0 0.0
    %1182 = vmatpush.msra.mxu0 0.0
    %1183 = vmatpush.msra.mxu0 0.0
    %1184 = vmatpush.msra.mxu0 0.0
    %1185 = vmatpush.msra.mxu0 0.0
    %1186 = vmatpush.msra.mxu0 0.0
    %v1187 = vand.u32 %v1059, 4294901760
    %v1188 = vsub.f32 %v1059, %v1187
    %1189 = vmatpush.msra.mxu0 %v1188
    %v1190 = vand.u32 %v1057, 4294901760
    %v1191 = vsub.f32 %v1057, %v1190
    %1192 = vmatpush.msra.mxu0 %v1191
    %v1193 = vand.u32 %v1068, 4294901760
    %v1194 = vsub.f32 %v1068, %v1193
    %1195 = vmatmul.f32.gmra.mxu0 %v1194
    %v1196 = vpop.f32.mrf.mxu0
    %v1197 = vadd.f32 %v1159, %v1196
    %v1198 = vand.u32 %v1071, 4294901760
    %v1199 = vsub.f32 %v1071, %v1198
    %1200 = vmatmul.f32.gmra.mxu0 %v1199
    %v1201 = vpop.f32.mrf.mxu0
    %v1202 = vadd.f32 %v1163, %v1201
    %v1203 = vand.u32 %v1074, 4294901760
    %v1204 = vsub.f32 %v1074, %v1203
    %1205 = vmatmul.f32.gmra.mxu0 %v1204
    %v1206 = vpop.f32.mrf.mxu0
    %v1207 = vadd.f32 %v1167, %v1206
    %v1208 = vand.u32 %v1077, 4294901760
    %v1209 = vsub.f32 %v1077, %v1208
    %1210 = vmatmul.f32.gmra.mxu0 %v1209
    %v1211 = vpop.f32.mrf.mxu0
    %v1212 = vadd.f32 %v1171, %v1211
    %1213 = vdwg.mxu0
    %1214 = vmatpush.msra.mxu0 0.0
    %1215 = vmatpush.msra.mxu0 0.0
    %1216 = vmatpush.msra.mxu0 0.0
    %1217 = vmatpush.msra.mxu0 0.0
    %1218 = vmatpush.msra.mxu0 0.0
    %1219 = vmatpush.msra.mxu0 0.0
    %1220 = vmatpush.msra.mxu0 0.0
    %1221 = vmatpush.msra.mxu0 0.0
    %1222 = vmatpush.msra.mxu0 0.0
    %1223 = vmatpush.msra.mxu0 0.0
    %1224 = vmatpush.msra.mxu0 0.0
    %1225 = vmatpush.msra.mxu0 0.0
    %1226 = vmatpush.msra.mxu0 0.0
    %1227 = vmatpush.msra.mxu0 0.0
    %v1228 = vand.u32 %v1059, 4294901760
    %1229 = vmatpush.msra.mxu0 %v1228
    %v1230 = vand.u32 %v1057, 4294901760
    %1231 = vmatpush.msra.mxu0 %v1230
    %v1232 = vand.u32 %v1068, 4294901760
    %v1233 = vsub.f32 %v1068, %v1232
    %v1234 = vand.u32 %v1233, 4294901760
    %1235 = vmatmul.f32.gmra.mxu0 %v1234
    %v1236 = vpop.f32.mrf.mxu0
    %v1237 = vadd.f32 %v1197, %v1236
    %v1238 = vand.u32 %v1071, 4294901760
    %v1239 = vsub.f32 %v1071, %v1238
    %v1240 = vand.u32 %v1239, 4294901760
    %1241 = vmatmul.f32.gmra.mxu0 %v1240
    %v1242 = vpop.f32.mrf.mxu0
    %v1243 = vadd.f32 %v1202, %v1242
    %v1244 = vand.u32 %v1074, 4294901760
    %v1245 = vsub.f32 %v1074, %v1244
    %v1246 = vand.u32 %v1245, 4294901760
    %1247 = vmatmul.f32.gmra.mxu0 %v1246
    %v1248 = vpop.f32.mrf.mxu0
    %v1249 = vadd.f32 %v1207, %v1248
    %v1250 = vand.u32 %v1077, 4294901760
    %v1251 = vsub.f32 %v1077, %v1250
    %v1252 = vand.u32 %v1251, 4294901760
    %1253 = vmatmul.f32.gmra.mxu0 %v1252
    %v1254 = vpop.f32.mrf.mxu0
    %v1255 = vadd.f32 %v1212, %v1254
    %1256 = vdwg.mxu0
    %1257 = vmatpush.msra.mxu0 0.0
    %1258 = vmatpush.msra.mxu0 0.0
    %1259 = vmatpush.msra.mxu0 0.0
    %1260 = vmatpush.msra.mxu0 0.0
    %1261 = vmatpush.msra.mxu0 0.0
    %1262 = vmatpush.msra.mxu0 0.0
    %1263 = vmatpush.msra.mxu0 0.0
    %1264 = vmatpush.msra.mxu0 0.0
    %1265 = vmatpush.msra.mxu0 0.0
    %1266 = vmatpush.msra.mxu0 0.0
    %1267 = vmatpush.msra.mxu0 0.0
    %1268 = vmatpush.msra.mxu0 0.0
    %1269 = vmatpush.msra.mxu0 0.0
    %1270 = vmatpush.msra.mxu0 0.0
    %v1271 = vand.u32 %v1059, 4294901760
    %v1272 = vsub.f32 %v1059, %v1271
    %v1273 = vand.u32 %v1272, 4294901760
    %1274 = vmatpush.msra.mxu0 %v1273
    %v1275 = vand.u32 %v1057, 4294901760
    %v1276 = vsub.f32 %v1057, %v1275
    %v1277 = vand.u32 %v1276, 4294901760
    %1278 = vmatpush.msra.mxu0 %v1277
    %v1279 = vand.u32 %v1068, 4294901760
    %1280 = vmatmul.f32.gmra.mxu0 %v1279
    %v1281 = vpop.f32.mrf.mxu0
    %v1282 = vadd.f32 %v1237, %v1281
    %v1283 = vand.u32 %v1071, 4294901760
    %1284 = vmatmul.f32.gmra.mxu0 %v1283
    %v1285 = vpop.f32.mrf.mxu0
    %v1286 = vadd.f32 %v1243, %v1285
    %v1287 = vand.u32 %v1074, 4294901760
    %1288 = vmatmul.f32.gmra.mxu0 %v1287
    %v1289 = vpop.f32.mrf.mxu0
    %v1290 = vadd.f32 %v1249, %v1289
    %v1291 = vand.u32 %v1077, 4294901760
    %1292 = vmatmul.f32.gmra.mxu0 %v1291
    %v1293 = vpop.f32.mrf.mxu0
    %v1294 = vadd.f32 %v1255, %v1293
    %1295 = vdwg.mxu0
    %1296 = vmatpush.msra.mxu0 0.0
    %1297 = vmatpush.msra.mxu0 0.0
    %1298 = vmatpush.msra.mxu0 0.0
    %1299 = vmatpush.msra.mxu0 0.0
    %1300 = vmatpush.msra.mxu0 0.0
    %1301 = vmatpush.msra.mxu0 0.0
    %1302 = vmatpush.msra.mxu0 0.0
    %1303 = vmatpush.msra.mxu0 0.0
    %1304 = vmatpush.msra.mxu0 0.0
    %1305 = vmatpush.msra.mxu0 0.0
    %1306 = vmatpush.msra.mxu0 0.0
    %1307 = vmatpush.msra.mxu0 0.0
    %1308 = vmatpush.msra.mxu0 0.0
    %1309 = vmatpush.msra.mxu0 0.0
    %v1310 = vand.u32 %v1059, 4294901760
    %1311 = vmatpush.msra.mxu0 %v1310
    %v1312 = vand.u32 %v1057, 4294901760
    %1313 = vmatpush.msra.mxu0 %v1312
    %v1314 = vand.u32 %v1068, 4294901760
    %1315 = vmatmul.f32.gmra.mxu0 %v1314
    %v1316 = vpop.f32.mrf.mxu0
    %v1317 = vadd.f32 %v1282, %v1316
    %v1318 = vand.u32 %v1071, 4294901760
    %1319 = vmatmul.f32.gmra.mxu0 %v1318
    %v1320 = vpop.f32.mrf.mxu0
    %v1321 = vadd.f32 %v1286, %v1320
    %v1322 = vand.u32 %v1074, 4294901760
    %1323 = vmatmul.f32.gmra.mxu0 %v1322
    %v1324 = vpop.f32.mrf.mxu0
    %v1325 = vadd.f32 %v1290, %v1324
    %v1326 = vand.u32 %v1077, 4294901760
    %1327 = vmatmul.f32.gmra.mxu0 %v1326
    %v1328 = vpop.f32.mrf.mxu0
    %v1329 = vadd.f32 %v1294, %v1328
    %1330 = vdwg.mxu0
    %1331 = vmatpush.msra.mxu0 0.0
    %1332 = vmatpush.msra.mxu0 0.0
    %1333 = vmatpush.msra.mxu0 0.0
    %1334 = vmatpush.msra.mxu0 0.0
    %1335 = vmatpush.msra.mxu0 0.0
    %1336 = vmatpush.msra.mxu0 0.0
    %1337 = vmatpush.msra.mxu0 0.0
    %1338 = vmatpush.msra.mxu0 0.0
    %1339 = vmatpush.msra.mxu0 0.0
    %1340 = vmatpush.msra.mxu0 0.0
    %1341 = vmatpush.msra.mxu0 0.0
    %1342 = vmatpush.msra.mxu0 0.0
    %1343 = vmatpush.msra.mxu0 0.0
    %1344 = vmatpush.msra.mxu0 0.0
    %v1345 = vand.u32 %v1060, 4294901760
    %1346 = vmatpush.msra.mxu0 %v1345
    %v1347 = vand.u32 %v1058, 4294901760
    %1348 = vmatpush.msra.mxu0 %v1347
    %v1349 = vand.u32 %v1068, 4294901760
    %v1350 = vsub.f32 %v1068, %v1349
    %v1351 = vand.u32 %v1350, 4294901760
    %v1352 = vsub.f32 %v1350, %v1351
    %v1353 = vand.u32 %v1352, 4294901760
    %1354 = vmatmul.f32.gmra.mxu0 %v1353
    %v1355 = vpop.f32.mrf.mxu0
    %v1356 = vadd.f32 0.0, %v1355
    %v1357 = vand.u32 %v1071, 4294901760
    %v1358 = vsub.f32 %v1071, %v1357
    %v1359 = vand.u32 %v1358, 4294901760
    %v1360 = vsub.f32 %v1358, %v1359
    %v1361 = vand.u32 %v1360, 4294901760
    %1362 = vmatmul.f32.gmra.mxu0 %v1361
    %v1363 = vpop.f32.mrf.mxu0
    %v1364 = vadd.f32 0.0, %v1363
    %v1365 = vand.u32 %v1074, 4294901760
    %v1366 = vsub.f32 %v1074, %v1365
    %v1367 = vand.u32 %v1366, 4294901760
    %v1368 = vsub.f32 %v1366, %v1367
    %v1369 = vand.u32 %v1368, 4294901760
    %1370 = vmatmul.f32.gmra.mxu0 %v1369
    %v1371 = vpop.f32.mrf.mxu0
    %v1372 = vadd.f32 0.0, %v1371
    %v1373 = vand.u32 %v1077, 4294901760
    %v1374 = vsub.f32 %v1077, %v1373
    %v1375 = vand.u32 %v1374, 4294901760
    %v1376 = vsub.f32 %v1374, %v1375
    %v1377 = vand.u32 %v1376, 4294901760
    %1378 = vmatmul.f32.gmra.mxu0 %v1377
    %v1379 = vpop.f32.mrf.mxu0
    %v1380 = vadd.f32 0.0, %v1379
    %1381 = vdwg.mxu0
    %1382 = vmatpush.msra.mxu0 0.0
    %1383 = vmatpush.msra.mxu0 0.0
    %1384 = vmatpush.msra.mxu0 0.0
    %1385 = vmatpush.msra.mxu0 0.0
    %1386 = vmatpush.msra.mxu0 0.0
    %1387 = vmatpush.msra.mxu0 0.0
    %1388 = vmatpush.msra.mxu0 0.0
    %1389 = vmatpush.msra.mxu0 0.0
    %1390 = vmatpush.msra.mxu0 0.0
    %1391 = vmatpush.msra.mxu0 0.0
    %1392 = vmatpush.msra.mxu0 0.0
    %1393 = vmatpush.msra.mxu0 0.0
    %1394 = vmatpush.msra.mxu0 0.0
    %1395 = vmatpush.msra.mxu0 0.0
    %v1396 = vand.u32 %v1060, 4294901760
    %v1397 = vsub.f32 %v1060, %v1396
    %v1398 = vand.u32 %v1397, 4294901760
    %v1399 = vsub.f32 %v1397, %v1398
    %v1400 = vand.u32 %v1399, 4294901760
    %1401 = vmatpush.msra.mxu0 %v1400
    %v1402 = vand.u32 %v1058, 4294901760
    %v1403 = vsub.f32 %v1058, %v1402
    %v1404 = vand.u32 %v1403, 4294901760
    %v1405 = vsub.f32 %v1403, %v1404
    %v1406 = vand.u32 %v1405, 4294901760
    %1407 = vmatpush.msra.mxu0 %v1406
    %v1408 = vand.u32 %v1068, 4294901760
    %1409 = vmatmul.f32.gmra.mxu0 %v1408
    %v1410 = vpop.f32.mrf.mxu0
    %v1411 = vadd.f32 %v1356, %v1410
    %v1412 = vand.u32 %v1071, 4294901760
    %1413 = vmatmul.f32.gmra.mxu0 %v1412
    %v1414 = vpop.f32.mrf.mxu0
    %v1415 = vadd.f32 %v1364, %v1414
    %v1416 = vand.u32 %v1074, 4294901760
    %1417 = vmatmul.f32.gmra.mxu0 %v1416
    %v1418 = vpop.f32.mrf.mxu0
    %v1419 = vadd.f32 %v1372, %v1418
    %v1420 = vand.u32 %v1077, 4294901760
    %1421 = vmatmul.f32.gmra.mxu0 %v1420
    %v1422 = vpop.f32.mrf.mxu0
    %v1423 = vadd.f32 %v1380, %v1422
    %1424 = vdwg.mxu0
    %1425 = vmatpush.msra.mxu0 0.0
    %1426 = vmatpush.msra.mxu0 0.0
    %1427 = vmatpush.msra.mxu0 0.0
    %1428 = vmatpush.msra.mxu0 0.0
    %1429 = vmatpush.msra.mxu0 0.0
    %1430 = vmatpush.msra.mxu0 0.0
    %1431 = vmatpush.msra.mxu0 0.0
    %1432 = vmatpush.msra.mxu0 0.0
    %1433 = vmatpush.msra.mxu0 0.0
    %1434 = vmatpush.msra.mxu0 0.0
    %1435 = vmatpush.msra.mxu0 0.0
    %1436 = vmatpush.msra.mxu0 0.0
    %1437 = vmatpush.msra.mxu0 0.0
    %1438 = vmatpush.msra.mxu0 0.0
    %v1439 = vand.u32 %v1060, 4294901760
    %v1440 = vsub.f32 %v1060, %v1439
    %1441 = vmatpush.msra.mxu0 %v1440
    %v1442 = vand.u32 %v1058, 4294901760
    %v1443 = vsub.f32 %v1058, %v1442
    %1444 = vmatpush.msra.mxu0 %v1443
    %v1445 = vand.u32 %v1068, 4294901760
    %v1446 = vsub.f32 %v1068, %v1445
    %1447 = vmatmul.f32.gmra.mxu0 %v1446
    %v1448 = vpop.f32.mrf.mxu0
    %v1449 = vadd.f32 %v1411, %v1448
    %v1450 = vand.u32 %v1071, 4294901760
    %v1451 = vsub.f32 %v1071, %v1450
    %1452 = vmatmul.f32.gmra.mxu0 %v1451
    %v1453 = vpop.f32.mrf.mxu0
    %v1454 = vadd.f32 %v1415, %v1453
    %v1455 = vand.u32 %v1074, 4294901760
    %v1456 = vsub.f32 %v1074, %v1455
    %1457 = vmatmul.f32.gmra.mxu0 %v1456
    %v1458 = vpop.f32.mrf.mxu0
    %v1459 = vadd.f32 %v1419, %v1458
    %v1460 = vand.u32 %v1077, 4294901760
    %v1461 = vsub.f32 %v1077, %v1460
    %1462 = vmatmul.f32.gmra.mxu0 %v1461
    %v1463 = vpop.f32.mrf.mxu0
    %v1464 = vadd.f32 %v1423, %v1463
    %1465 = vdwg.mxu0
    %1466 = vmatpush.msra.mxu0 0.0
    %1467 = vmatpush.msra.mxu0 0.0
    %1468 = vmatpush.msra.mxu0 0.0
    %1469 = vmatpush.msra.mxu0 0.0
    %1470 = vmatpush.msra.mxu0 0.0
    %1471 = vmatpush.msra.mxu0 0.0
    %1472 = vmatpush.msra.mxu0 0.0
    %1473 = vmatpush.msra.mxu0 0.0
    %1474 = vmatpush.msra.mxu0 0.0
    %1475 = vmatpush.msra.mxu0 0.0
    %1476 = vmatpush.msra.mxu0 0.0
    %1477 = vmatpush.msra.mxu0 0.0
    %1478 = vmatpush.msra.mxu0 0.0
    %1479 = vmatpush.msra.mxu0 0.0
    %v1480 = vand.u32 %v1060, 4294901760
    %1481 = vmatpush.msra.mxu0 %v1480
    %v1482 = vand.u32 %v1058, 4294901760
    %1483 = vmatpush.msra.mxu0 %v1482
    %v1484 = vand.u32 %v1068, 4294901760
    %v1485 = vsub.f32 %v1068, %v1484
    %v1486 = vand.u32 %v1485, 4294901760
    %1487 = vmatmul.f32.gmra.mxu0 %v1486
    %v1488 = vpop.f32.mrf.mxu0
    %v1489 = vadd.f32 %v1449, %v1488
    %v1490 = vand.u32 %v1071, 4294901760
    %v1491 = vsub.f32 %v1071, %v1490
    %v1492 = vand.u32 %v1491, 4294901760
    %1493 = vmatmul.f32.gmra.mxu0 %v1492
    %v1494 = vpop.f32.mrf.mxu0
    %v1495 = vadd.f32 %v1454, %v1494
    %v1496 = vand.u32 %v1074, 4294901760
    %v1497 = vsub.f32 %v1074, %v1496
    %v1498 = vand.u32 %v1497, 4294901760
    %1499 = vmatmul.f32.gmra.mxu0 %v1498
    %v1500 = vpop.f32.mrf.mxu0
    %v1501 = vadd.f32 %v1459, %v1500
    %v1502 = vand.u32 %v1077, 4294901760
    %v1503 = vsub.f32 %v1077, %v1502
    %v1504 = vand.u32 %v1503, 4294901760
    %1505 = vmatmul.f32.gmra.mxu0 %v1504
    %v1506 = vpop.f32.mrf.mxu0
    %v1507 = vadd.f32 %v1464, %v1506
    %1508 = vdwg.mxu0
    %1509 = vmatpush.msra.mxu0 0.0
    %1510 = vmatpush.msra.mxu0 0.0
    %1511 = vmatpush.msra.mxu0 0.0
    %1512 = vmatpush.msra.mxu0 0.0
    %1513 = vmatpush.msra.mxu0 0.0
    %1514 = vmatpush.msra.mxu0 0.0
    %1515 = vmatpush.msra.mxu0 0.0
    %1516 = vmatpush.msra.mxu0 0.0
    %1517 = vmatpush.msra.mxu0 0.0
    %1518 = vmatpush.msra.mxu0 0.0
    %1519 = vmatpush.msra.mxu0 0.0
    %1520 = vmatpush.msra.mxu0 0.0
    %1521 = vmatpush.msra.mxu0 0.0
    %1522 = vmatpush.msra.mxu0 0.0
    %v1523 = vand.u32 %v1060, 4294901760
    %v1524 = vsub.f32 %v1060, %v1523
    %v1525 = vand.u32 %v1524, 4294901760
    %1526 = vmatpush.msra.mxu0 %v1525
    %v1527 = vand.u32 %v1058, 4294901760
    %v1528 = vsub.f32 %v1058, %v1527
    %v1529 = vand.u32 %v1528, 4294901760
    %1530 = vmatpush.msra.mxu0 %v1529
    %v1531 = vand.u32 %v1068, 4294901760
    %1532 = vmatmul.f32.gmra.mxu0 %v1531
    %v1533 = vpop.f32.mrf.mxu0
    %v1534 = vadd.f32 %v1489, %v1533
    %v1535 = vand.u32 %v1071, 4294901760
    %1536 = vmatmul.f32.gmra.mxu0 %v1535
    %v1537 = vpop.f32.mrf.mxu0
    %v1538 = vadd.f32 %v1495, %v1537
    %v1539 = vand.u32 %v1074, 4294901760
    %1540 = vmatmul.f32.gmra.mxu0 %v1539
    %v1541 = vpop.f32.mrf.mxu0
    %v1542 = vadd.f32 %v1501, %v1541
    %v1543 = vand.u32 %v1077, 4294901760
    %1544 = vmatmul.f32.gmra.mxu0 %v1543
    %v1545 = vpop.f32.mrf.mxu0
    %v1546 = vadd.f32 %v1507, %v1545
    %1547 = vdwg.mxu0
    %1548 = vmatpush.msra.mxu0 0.0
    %1549 = vmatpush.msra.mxu0 0.0
    %1550 = vmatpush.msra.mxu0 0.0
    %1551 = vmatpush.msra.mxu0 0.0
    %1552 = vmatpush.msra.mxu0 0.0
    %1553 = vmatpush.msra.mxu0 0.0
    %1554 = vmatpush.msra.mxu0 0.0
    %1555 = vmatpush.msra.mxu0 0.0
    %1556 = vmatpush.msra.mxu0 0.0
    %1557 = vmatpush.msra.mxu0 0.0
    %1558 = vmatpush.msra.mxu0 0.0
    %1559 = vmatpush.msra.mxu0 0.0
    %1560 = vmatpush.msra.mxu0 0.0
    %1561 = vmatpush.msra.mxu0 0.0
    %v1562 = vand.u32 %v1060, 4294901760
    %1563 = vmatpush.msra.mxu0 %v1562
    %v1564 = vand.u32 %v1058, 4294901760
    %1565 = vmatpush.msra.mxu0 %v1564
    %v1566 = vand.u32 %v1068, 4294901760
    %1567 = vmatmul.f32.gmra.mxu0 %v1566
    %v1568 = vpop.f32.mrf.mxu0
    %v1569 = vadd.f32 %v1534, %v1568
    %v1570 = vand.u32 %v1071, 4294901760
    %1571 = vmatmul.f32.gmra.mxu0 %v1570
    %v1572 = vpop.f32.mrf.mxu0
    %v1573 = vadd.f32 %v1538, %v1572
    %v1574 = vand.u32 %v1074, 4294901760
    %1575 = vmatmul.f32.gmra.mxu0 %v1574
    %v1576 = vpop.f32.mrf.mxu0
    %v1577 = vadd.f32 %v1542, %v1576
    %v1578 = vand.u32 %v1077, 4294901760
    %1579 = vmatmul.f32.gmra.mxu0 %v1578
    %v1580 = vpop.f32.mrf.mxu0
    %v1581 = vadd.f32 %v1546, %v1580
    %1582 = vdwg.mxu0
    %v1583 = vmul.f32 %v1023, %v1317
    %v1584 = vmul.f32 %v1024, %v1569
    %v1585 = vmul.f32 %v1025, %v1321
    %v1586 = vmul.f32 %v1026, %v1573
    %v1587 = vadd.f32 %v1583, %v1585
    %v1588 = vrot.slane %v1587, 4
    %v1589 = vadd.f32 %v1587, %v1588
    %v1590 = vrot.slane %v1589, 2
    %v1591 = vadd.f32 %v1589, %v1590
    %v1592 = vrot.slane %v1591, 1
    %v1593 = vadd.f32 %v1591, %v1592
    %v1594 = vadd.f32 %v1584, %v1586
    %v1595 = vrot.slane %v1594, 4
    %v1596 = vadd.f32 %v1594, %v1595
    %v1597 = vrot.slane %v1596, 2
    %v1598 = vadd.f32 %v1596, %v1597
    %v1599 = vrot.slane %v1598, 1
    %v1600 = vadd.f32 %v1598, %v1599
    %v1601 = vmul.f32 %v1023, %v1325
    %v1602 = vmul.f32 %v1024, %v1577
    %v1603 = vmul.f32 %v1025, %v1329
    %v1604 = vmul.f32 %v1026, %v1581
    %v1605 = vadd.f32 %v1601, %v1603
    %v1606 = vrot.slane %v1605, 4
    %v1607 = vadd.f32 %v1605, %v1606
    %v1608 = vrot.slane %v1607, 2
    %v1609 = vadd.f32 %v1607, %v1608
    %v1610 = vrot.slane %v1609, 1
    %v1611 = vadd.f32 %v1609, %v1610
    %v1612 = vadd.f32 %v1602, %v1604
    %v1613 = vrot.slane %v1612, 4
    %v1614 = vadd.f32 %v1612, %v1613
    %v1615 = vrot.slane %v1614, 2
    %v1616 = vadd.f32 %v1614, %v1615
    %v1617 = vrot.slane %v1616, 1
    %v1618 = vadd.f32 %v1616, %v1617
    %v1623 = vrot.slane %v1600, 7
    %v1624 = vrot.slane %v1618, 7
    %vm1625 = vcmask 1040384
    %v1626 = vsel %vm1625, %v1593, %v1623
    %v1627 = vsel %vm1625, %v1611, %v1624
    %v1630 = vadd.f32 %v838, %v1626
    %v1631 = vadd.f32 %v839, %v1627
  $region21: #{vecint_pallas.1} parent=0 // loop_footer
    %s837 = sadd.s32 1, %s833
  $region22: #{vecint_pallas.1} parent=0 // loop_footer_branch
    %832 = sbr.rel target = $region18
  $region23: #{vecint_pallas.1} parent=0 // loop_exit
    _
  %s1632 = scalar_lea.vmem %s2, 4
  %1633 = vst.msk [vmem:[%s1632] sm:$0x3] %vm824, %v838
  %1634 = vst.msk [vmem:[%s1632 + $0x2] sm:$0x3] %vm824, %v839
  // Predicated region
  $region24: #{vecint_pallas.1} parent=0 // pred_check
    _
  $region25: #{vecint_pallas.1} parent=0 // pred_check_branch
    %1636 = sbr.rel (0) target = $region27
  $region26: #{vecint_pallas.1} parent=0 // pred_region
    _
  $region27: #{vecint_pallas.1} parent=0 // pred_fallthru
    _
  // Predicated region
  $region28: #{vecint_pallas.1} parent=0 // pred_check
    _
  $region29: #{vecint_pallas.1} parent=0 // pred_check_branch
    %1638 = sbr.rel (0) target = $region31
  $region30: #{vecint_pallas.1} parent=0 // pred_region
    _
  $region31: #{vecint_pallas.1} parent=0 // pred_fallthru
    _

</llo_original>
